<compile_context>
chip_gen: v7x
topology: tpu7x:2x2x1
jax: 0.10.0
libtpu: 0.0.40
codegen_flags: <defaults>
</compile_context>

<pallas_src>
import functools
import math

import jax
import jax.numpy as jnp
from jax.experimental import pallas as pl
from jax.experimental.pallas import tpu as pltpu

BN_EPS = 1e-5
LEAKY_SLOPE = 0.01
# bf16 matmul operands target the MXU (f32 accumulation, f32 BN math).  Set to
# jnp.float32 for bit-tighter numerics; callers expecting f32-exact ConvTranspose
# should flip this flag.
MATMUL_DTYPE = jnp.bfloat16
# dtype of the conv+bias intermediate written to HBM between pass 1 and pass 2.
Y_DTYPE = jnp.bfloat16


def _vmem_limit_bytes():
    """Explicit VMEM budget: ~3/4 of the physical capacity of this generation."""
    try:
        return int(pltpu.get_tpu_info().vmem_capacity_bytes * 3 // 4)
    except Exception:  # pragma: no cover - conservative fallback
        return 64 * 1024 * 1024


def _pick_h_tile(Hp, Wp, row_bytes, requested=None, target_bytes=4 << 20):
    """Divisor of Hp such that the y block's sublane dim (TH*Wp) stays 8-aligned."""
    valid = [d for d in range(1, Hp + 1)
             if Hp % d == 0 and (d == Hp or (d * Wp) % 8 == 0)]
    if requested is not None:
        fitting = [d for d in valid if d <= requested]
    else:
        fitting = [d for d in valid if d * row_bytes <= target_bytes]
    return max(fitting) if fitting else Hp


def _pick_row_tile(R, row_bytes, target_bytes=8 << 20):
    """Divisor of R (8-aligned or == R) sized by bytes, not a fixed row cap."""
    valid = [d for d in range(1, R + 1)
             if R % d == 0 and (d == R or d % 8 == 0)]
    fitting = [d for d in valid if d * row_bytes <= target_bytes]
    return max(fitting) if fitting else min(valid)


# ---------------------------------------------------------------------------
# Pass 1: phase-packed transposed conv tile + bias + BN partial statistics.
# ---------------------------------------------------------------------------
def tconv_phasepack_kernel(x_ref, w_ref, b_ref, y_ref, st_ref, col_ref, *,
                           TH, Wp, Qe, Se, Cin2, sH, sW, C2, Hout, Wout,
                           multi_h, has_crop):
    # x_ref  : (Hpad, Wpad, Cin2)   MATMUL_DTYPE  full padded input, batch n
    # w_ref  : (Qe*Se*Cin2, P*C2)   MATMUL_DTYPE  phase-packed extended taps
    # b_ref  : (1, P*C2)            f32
    # y_ref  : (TH*Wp, P*C2)        Y_DTYPE       conv + bias for this H tile
    # st_ref : (2, P*C2)            f32           [sum, sum_sq] over valid rows
    # col_ref: (TH*Wp, Qe*Se*Cin2)  MATMUL_DTYPE  im2col scratch (VMEM)
    h0 = pl.multiple_of(pl.program_id(1) * TH, TH) if multi_h else 0

    # im2col over the (small, static) Qe*Se tap grid -> one long-K matmul.
    # Accumulation happens inside the MXU (MRF/MRB); no VMEM acc round-trips.
    for q in range(Qe):
        for s in range(Se):
            t = q * Se + s
            patch = x_ref[pl.ds(h0 + q, TH), s:s + Wp, :]          # (TH, Wp, Cin2)
            col_ref[:, t * Cin2:(t + 1) * Cin2] = patch.reshape(TH * Wp, Cin2)

    acc = jnp.dot(col_ref[...], w_ref[...],
                  preferred_element_type=jnp.float32) + b_ref[...]
    y_ref[...] = acc.astype(y_ref.dtype)

    # Training-mode BatchNorm partials from the f32 accumulator.  Positions that
    # fall past (Hout, Wout) after the phase interleave are excluded (only when
    # Hout % sH != 0 or Wout % sW != 0).
    if has_crop:
        PC2 = sH * sW * C2
        rid = jax.lax.broadcasted_iota(jnp.int32, (TH * Wp, 1), 0)
        li = rid // Wp
        jj = rid - li * Wp
        cid = jax.lax.broadcasted_iota(jnp.int32, (1, PC2), 1)
        ph = cid // (sW * C2)
        pw = (cid // C2) % sW
        ok = (((h0 + li) * sH + ph) < Hout) & ((jj * sW + pw) < Wout)
        vals = jnp.where(ok, acc, 0.0)
    else:
        vals = acc
    st_ref[0:1, :] = jnp.sum(vals, axis=0, keepdims=True)
    st_ref[1:2, :] = jnp.sum(vals * vals, axis=0, keepdims=True)


# ---------------------------------------------------------------------------
# Pass 2: lane-dense BatchNorm normalize + LeakyReLU (bf16 in, f32 out).
# ---------------------------------------------------------------------------
def bn_act_kernel(y_ref, scale_ref, shift_ref, o_ref):
    z = y_ref[...].astype(jnp.float32) * scale_ref[...] + shift_ref[...]
    o_ref[...] = jnp.where(z >= 0, z, LEAKY_SLOPE * z)


def complex_decoder_forward(x, params, *, stride, padding, output_padding,
                            h_tile=None):
    """x: (N, Cin, H, W, 2) float32 -> (N, Cout, Hout, Wout, 2) float32."""
    w_re, w_im, b_re, b_im, g_re, be_re, g_im, be_im = params
    N, Cin, H, W, _ = x.shape
    _, Cout, kH, kW = w_re.shape
    sH, sW = stride
    pH, pW = padding
    opH, opW = output_padding
    # TODO(synk): padding > kernel_size - 1 would need extra cropping; not handled.
    assert kH - 1 - pH >= 0 and kW - 1 - pW >= 0

    Cin2, C2 = 2 * Cin, 2 * Cout
    P = sH * sW
    PC2 = P * C2
    Hout = (H - 1) * sH - 2 * pH + kH + opH
    Wout = (W - 1) * sW - 2 * pW + kW + opW

    # ---- static polyphase geometry, phase-packed into output channels -------
    padH, padW = kH - 1 - pH, kW - 1 - pW
    Q, S = -(-kH // sH), -(-kW // sW)             # taps per phase
    Hp, Wp = -(-Hout // sH), -(-Wout // sW)       # phase-output grid
    r_h = [(padH - ph) % sH for ph in range(sH)]
    b_h = [(ph + r_h[ph] - padH) // sH for ph in range(sH)]
    r_w = [(padW - pw) % sW for pw in range(sW)]
    b_w = [(pw + r_w[pw] - padW) // sW for pw in range(sW)]
    m0h, m0w = min(b_h), min(b_w)
    dh = [b - m0h for b in b_h]                   # each in {0, 1}
    dw = [b - m0w for b in b_w]
    Qe, Se = Q + max(dh), S + max(dw)             # extended taps (shared window)
    Hu, Wu = Hp + Qe - 1, Wp + Se - 1             # window the kernel reads
    pad_t, pad_l = -m0h, -m0w                     # m0h, m0w <= 0 by construction
    pad_b = max(0, Hu - (H + pad_t))
    pad_r = max(0, Wu - (W + pad_l))
    has_crop = (Hp * sH != Hout) or (Wp * sW != Wout)

    # ---- interface glue: NCHW(,2) -> NHWC with channels [real | imag] -------
    x2 = jnp.transpose(x, (0, 2, 3, 4, 1)).reshape(N, H, W, Cin2)
    xpad = jnp.pad(x2, ((0, 0), (pad_t, pad_b), (pad_l, pad_r), (0, 0)))
    xpad = xpad.astype(MATMUL_DTYPE)
    Hpad, Wpad = xpad.shape[1], xpad.shape[2]

    def flip(w):   # (Cin, Cout, kH, kW) -> (kH, kW, Cin, Cout), spatially flipped
        return jnp.transpose(w[:, :, ::-1, ::-1], (2, 3, 0, 1))

    wre_f, wim_f = flip(w_re), flip(w_im)
    wf = jnp.concatenate([
        jnp.concatenate([wre_f, wim_f], axis=3),      # contributions of real inputs
        jnp.concatenate([-wim_f, wre_f], axis=3),     # contributions of imag inputs
    ], axis=2)                                        # (kH, kW, 2Cin, 2Cout)
    wf_pad = jnp.pad(wf, ((0, Q * sH - kH), (0, S * sW - kW), (0, 0), (0, 0)))

    # Phase-packed extended weights: all sH*sW phases become output channels of
    # ONE stride-1 conv over a single shared window (no per-phase input slabs).
    w_ext = jnp.zeros((Qe, Se, Cin2, P, C2), jnp.float32)
    for ph in range(sH):
        for pw in range(sW):
            g = ph * sW + pw
            taps = wf_pad[r_h[ph]::sH, r_w[pw]::sW]            # (Q, S, Cin2, C2)
            w_ext = w_ext.at[dh[ph]:dh[ph] + Q, dw[pw]:dw[pw] + S, :, g, :].set(taps)
    K = Qe * Se * Cin2
    w2d = w_ext.reshape(K, PC2).astype(MATMUL_DTYPE)

    bias2 = jnp.concatenate([b_re - b_im, b_re + b_im])        # (C2,)
    bias_ext = jnp.tile(bias2, P).reshape(1, PC2).astype(jnp.float32)
    gamma2 = jnp.concatenate([g_re, g_im])
    beta2 = jnp.concatenate([be_re, be_im])

    # ---- pass 1: phase-packed conv + bias + BN partial stats (Pallas) -------
    y_row_bytes = Wp * (PC2 * 6 + K * 2)          # rough per-output-row VMEM cost
    TH = _pick_h_tile(Hp, Wp, y_row_bytes, requested=h_tile)
    nHt = Hp // TH
    multi_h = nHt > 1
    # TODO(synk): for extremely large inputs the per-batch x slab itself should be
    # halo-tiled with memory_space=pl.ANY + manual make_async_copy.

    kernel1 = functools.partial(
        tconv_phasepack_kernel, TH=TH, Wp=Wp, Qe=Qe, Se=Se, Cin2=Cin2,
        sH=sH, sW=sW, C2=C2, Hout=Hout, Wout=Wout,
        multi_h=multi_h, has_crop=has_crop)

    y, stats = pl.pallas_call(
        kernel1,
        out_shape=(jax.ShapeDtypeStruct((N, Hp * Wp, PC2), Y_DTYPE),
                   jax.ShapeDtypeStruct((N, nHt, 2, PC2), jnp.float32)),
        grid_spec=pltpu.PrefetchScalarGridSpec(
            num_scalar_prefetch=0,
            grid=(N, nHt),
            in_specs=[
                # Full padded slab for batch n; block index ignores the H-tile
                # axis, so the slab is fetched once per batch.
                pl.BlockSpec((None, Hpad, Wpad, Cin2), lambda n, h: (n, 0, 0, 0)),
                pl.BlockSpec((K, PC2), lambda n, h: (0, 0)),
                pl.BlockSpec((1, PC2), lambda n, h: (0, 0)),
            ],
            out_specs=[
                pl.BlockSpec((None, TH * Wp, PC2), lambda n, h: (n, h, 0)),
                pl.BlockSpec((None, None, 2, PC2), lambda n, h: (n, h, 0, 0)),
            ],
            scratch_shapes=[pltpu.VMEM((TH * Wp, K), MATMUL_DTYPE)],
        ),
        compiler_params=pltpu.CompilerParams(
            dimension_semantics=("parallel", "parallel"),
            vmem_limit_bytes=_vmem_limit_bytes()),
    )(xpad, w2d, bias_ext)

    # ---- finalize BatchNorm statistics (tiny, plain JAX) --------------------
    count = N * Hout * Wout
    st5 = stats.reshape(N, nHt, 2, P, C2)
    sums = jnp.sum(st5, axis=(0, 1, 3))           # (2, C2): [sum, sum_sq]
    mean = sums[0] / count
    # TODO(synk): E[x^2]-E[x]^2 in f32 can cancel for huge N*H*W with large means;
    # switch to a per-tile Welford combine if that regime matters.
    var = jnp.maximum(sums[1] / count - mean * mean, 0.0)       # biased variance
    inv = jax.lax.rsqrt(var + BN_EPS)
    scale = gamma2 * inv
    shift = beta2 - mean * scale
    scale_ext = jnp.tile(scale, P)                # matches y channel order (ph,pw,c)
    shift_ext = jnp.tile(shift, P)

    # ---- pass 2: normalize + LeakyReLU, fully lane-dense flat view ----------
    WC = Wp * PC2
    fold = 128 // math.gcd(WC, 128)               # rows folded to reach L % 128 == 0
    if (N * Hp) % fold != 0:
        fold = 1                                  # fallback: still correct (masked)
    L = WC * fold
    R = (N * Hp) // fold
    tile_r = _pick_row_tile(R, L * 6)             # bf16 in + f32 out per element
    y_flat = y.reshape(R, L)                      # free reshape (row-major)
    scale_row = jnp.tile(scale_ext, L // PC2).reshape(1, L)
    shift_row = jnp.tile(shift_ext, L // PC2).reshape(1, L)

    out_flat = pl.pallas_call(
        bn_act_kernel,
        out_shape=jax.ShapeDtypeStruct((R, L), jnp.float32),
        grid=(R // tile_r,),
        in_specs=[pl.BlockSpec((tile_r, L), lambda r: (r, 0)),
                  pl.BlockSpec((1, L), lambda r: (0, 0)),
                  pl.BlockSpec((1, L), lambda r: (0, 0))],
        out_specs=pl.BlockSpec((tile_r, L), lambda r: (r, 0)),
        compiler_params=pltpu.CompilerParams(
            dimension_semantics=("parallel",),
            vmem_limit_bytes=_vmem_limit_bytes()),
    )(y_flat, scale_row, shift_row)

    # ---- interface glue: phase interleave folded into the single unavoidable
    # NCHW(,2) output transpose; every reshape below is row-major (free).
    out6 = out_flat.reshape(N, Hp, Wp, sH, sW, 2, Cout)
    out = jnp.transpose(out6, (0, 6, 1, 3, 2, 4, 5))     # (N,Cout,Hp,sH,Wp,sW,2)
    out = out.reshape(N, Cout, Hp * sH, Wp * sW, 2)[:, :, :Hout, :Wout, :]
    return out


def reference_forward(x, params, *, stride, padding, output_padding):
    """Independent pure-JAX reference mirroring the PyTorch Decoder (complex=True)."""
    w_re, w_im, b_re, b_im, g_re, be_re, g_im, be_im = params
    kH, kW = w_re.shape[2], w_re.shape[3]
    pH, pW = padding
    opH, opW = output_padding

    def tconv(inp, w, b):
        wc = jnp.transpose(w[:, :, ::-1, ::-1], (1, 0, 2, 3))      # OIHW, flipped
        pads = ((kH - 1 - pH, kH - 1 - pH + opH),
                (kW - 1 - pW, kW - 1 - pW + opW))
        out = jax.lax.conv_general_dilated(
            inp, wc, window_strides=(1, 1), padding=pads,
            lhs_dilation=stride, rhs_dilation=(1, 1),
            dimension_numbers=('NCHW', 'OIHW', 'NCHW'))
        return out + b.reshape(1, -1, 1, 1)

    xr, xi = x[..., 0], x[..., 1]
    real = tconv(xr, w_re, b_re) - tconv(xi, w_im, b_im)
    imag = tconv(xi, w_re, b_re) + tconv(xr, w_im, b_im)

    def bn(v, g, b):
        m = v.mean(axis=(0, 2, 3), keepdims=True)
        va = ((v - m) ** 2).mean(axis=(0, 2, 3), keepdims=True)
        return (v - m) / jnp.sqrt(va + BN_EPS) * g.reshape(1, -1, 1, 1) \
            + b.reshape(1, -1, 1, 1)

    out = jnp.stack([bn(real, g_re, be_re), bn(imag, g_im, be_im)], axis=-1)
    return jnp.where(out >= 0, out, LEAKY_SLOPE * out)


if __name__ == "__main__":
    N, Cin, Cout = 2, 4, 4
    H, W = 8, 8

    def run_case(name, key, kernel_size, stride, padding, output_padding,
                 h_tile=None):
        kH, kW = kernel_size
        ks = jax.random.split(key, 9)
        x = jax.random.normal(ks[0], (N, Cin, H, W, 2), jnp.float32)
        w_re = 0.1 * jax.random.normal(ks[1], (Cin, Cout, kH, kW), jnp.float32)
        w_im = 0.1 * jax.random.normal(ks[2], (Cin, Cout, kH, kW), jnp.float32)
        b_re = 0.1 * jax.random.normal(ks[3], (Cout,), jnp.float32)
        b_im = 0.1 * jax.random.normal(ks[4], (Cout,), jnp.float32)
        g_re = 1.0 + 0.1 * jax.random.normal(ks[5], (Cout,), jnp.float32)
        g_im = 1.0 + 0.1 * jax.random.normal(ks[6], (Cout,), jnp.float32)
        be_re = 0.1 * jax.random.normal(ks[7], (Cout,), jnp.float32)
        be_im = 0.1 * jax.random.normal(ks[8], (Cout,), jnp.float32)
        params = (w_re, w_im, b_re, b_im, g_re, be_re, g_im, be_im)

        fwd = jax.jit(functools.partial(
            complex_decoder_forward, stride=stride, padding=padding,
            output_padding=output_padding, h_tile=h_tile))
        out = jax.block_until_ready(fwd(x, params))

        Hout = (H - 1) * stride[0] - 2 * padding[0] + kH + output_padding[0]
        Wout = (W - 1) * stride[1] - 2 * padding[1] + kW + output_padding[1]
        assert out.shape == (N, Cout, Hout, Wout, 2), (name, out.shape)

        ref = reference_forward(x, params, stride=stride, padding=padding,
                                output_padding=output_padding)
        max_err = float(jnp.max(jnp.abs(out - ref)))
        # tolerance accounts for bf16 MXU operands and the bf16 intermediate
        # (accumulation and BN statistics are f32)
        assert jnp.allclose(out, ref, atol=3e-2, rtol=3e-2), (name, max_err)

    master = jax.random.PRNGKey(0)
    k1, k2, k3, k4 = jax.random.split(master, 4)
    # Decoder-style config (stride 2, output_padding 1): single H tile.
    run_case("base", k1, (3, 3), (2, 2), (1, 1), (1, 1))
    # Same config with forced H-tiling: exercises the multi-tile / dynamic-window
    # path of pass 1.
    run_case("h_tiled", k2, (3, 3), (2, 2), (1, 1), (1, 1), h_tile=4)
    # output_padding 0: output crop + masked BN statistics path.
    run_case("cropped", k3, (3, 3), (2, 2), (1, 1), (0, 0))
    # Asymmetric kernel/stride: exercises the extended-tap (Se = S+1) packing.
    run_case("asym", k4, (3, 4), (1, 2), (1, 1), (0, 1))

    print("KERNEL_OK")
</pallas_src>

<mosaic_0001>
module attributes {stable_mosaic.version = 11 : i64} {
  func.func @tconv_phasepack_kernel(%arg0: i32, %arg1: i32, %arg2: memref<1x9x9x8xbf16, #tpu.memory_space<vmem>>, %arg3: memref<32x32xbf16, #tpu.memory_space<vmem>>, %arg4: memref<1x32xf32, #tpu.memory_space<vmem>>, %arg5: memref<1x64x32xbf16, #tpu.memory_space<vmem>>, %arg6: memref<1x1x2x32xf32, #tpu.memory_space<vmem>>, %arg7: memref<64x32xbf16, #tpu.memory_space<vmem>>) attributes {dimension_semantics = [#tpu.dimension_semantics<parallel>, #tpu.dimension_semantics<parallel>], iteration_bounds = array<i64: 2, 1>, scalar_prefetch = 0 : i64, scratch_operands = 1 : i64, tpu.core_type = #tpu.core_type<tc>, window_params = [{transform_indices = @transform_0, window_bounds = array<i64: 1, 9, 9, 8>}, {pipeline_mode = #tpu.pipeline_mode<synchronous>, transform_indices = @transform_1, window_bounds = array<i64: 32, 32>}, {pipeline_mode = #tpu.pipeline_mode<synchronous>, transform_indices = @transform_2, window_bounds = array<i64: 1, 32>}, {transform_indices = @transform_3, window_bounds = array<i64: 1, 64, 32>}, {transform_indices = @transform_4, window_bounds = array<i64: 1, 1, 2, 32>}]} {
    %c0 = arith.constant 0 : index
    %c0_0 = arith.constant 0 : index
    %c0_1 = arith.constant 0 : index
    %c0_2 = arith.constant 0 : index
    %0 = vector.load %arg2[%c0, %c0_0, %c0_1, %c0_2] : memref<1x9x9x8xbf16, #tpu.memory_space<vmem>>, vector<1x8x8x8xbf16>
    %1 = vector.shape_cast %0 : vector<1x8x8x8xbf16> to vector<8x8x8xbf16>
    %2 = vector.shape_cast %1 : vector<8x8x8xbf16> to vector<64x8xbf16>
    %c0_3 = arith.constant 0 : index
    %c0_4 = arith.constant 0 : index
    %3 = vector.load %arg7[%c0_3, %c0_4] : memref<64x32xbf16, #tpu.memory_space<vmem>>, vector<64x8xbf16>
    tpu.vector_store %arg7[%c0_3, %c0_4], %2 {strides = array<i32>} : memref<64x32xbf16, #tpu.memory_space<vmem>>, vector<64x8xbf16>,
    %c0_5 = arith.constant 0 : index
    %c0_6 = arith.constant 0 : index
    %c1 = arith.constant 1 : index
    %c0_7 = arith.constant 0 : index
    %4 = vector.load %arg2[%c0_5, %c0_6, %c1, %c0_7] : memref<1x9x9x8xbf16, #tpu.memory_space<vmem>>, vector<1x8x8x8xbf16>
    %5 = vector.shape_cast %4 : vector<1x8x8x8xbf16> to vector<8x8x8xbf16>
    %6 = vector.shape_cast %5 : vector<8x8x8xbf16> to vector<64x8xbf16>
    %c0_8 = arith.constant 0 : index
    %c8 = arith.constant 8 : index
    %7 = vector.load %arg7[%c0_8, %c8] : memref<64x32xbf16, #tpu.memory_space<vmem>>, vector<64x8xbf16>
    tpu.vector_store %arg7[%c0_8, %c8], %6 {strides = array<i32>} : memref<64x32xbf16, #tpu.memory_space<vmem>>, vector<64x8xbf16>,
    %c0_9 = arith.constant 0 : index
    %c1_10 = arith.constant 1 : index
    %c0_11 = arith.constant 0 : index
    %c0_12 = arith.constant 0 : index
    %8 = vector.load %arg2[%c0_9, %c1_10, %c0_11, %c0_12] : memref<1x9x9x8xbf16, #tpu.memory_space<vmem>>, vector<1x8x8x8xbf16>
    %9 = vector.shape_cast %8 : vector<1x8x8x8xbf16> to vector<8x8x8xbf16>
    %10 = vector.shape_cast %9 : vector<8x8x8xbf16> to vector<64x8xbf16>
    %c0_13 = arith.constant 0 : index
    %c16 = arith.constant 16 : index
    %11 = vector.load %arg7[%c0_13, %c16] : memref<64x32xbf16, #tpu.memory_space<vmem>>, vector<64x8xbf16>
    tpu.vector_store %arg7[%c0_13, %c16], %10 {strides = array<i32>} : memref<64x32xbf16, #tpu.memory_space<vmem>>, vector<64x8xbf16>,
    %c0_14 = arith.constant 0 : index
    %c1_15 = arith.constant 1 : index
    %c1_16 = arith.constant 1 : index
    %c0_17 = arith.constant 0 : index
    %12 = vector.load %arg2[%c0_14, %c1_15, %c1_16, %c0_17] : memref<1x9x9x8xbf16, #tpu.memory_space<vmem>>, vector<1x8x8x8xbf16>
    %13 = vector.shape_cast %12 : vector<1x8x8x8xbf16> to vector<8x8x8xbf16>
    %14 = vector.shape_cast %13 : vector<8x8x8xbf16> to vector<64x8xbf16>
    %c0_18 = arith.constant 0 : index
    %c24 = arith.constant 24 : index
    %15 = vector.load %arg7[%c0_18, %c24] : memref<64x32xbf16, #tpu.memory_space<vmem>>, vector<64x8xbf16>
    tpu.vector_store %arg7[%c0_18, %c24], %14 {strides = array<i32>} : memref<64x32xbf16, #tpu.memory_space<vmem>>, vector<64x8xbf16>,
    %c0_19 = arith.constant 0 : index
    %c0_20 = arith.constant 0 : index
    %16 = vector.load %arg7[%c0_19, %c0_20] : memref<64x32xbf16, #tpu.memory_space<vmem>>, vector<64x32xbf16>
    %c0_21 = arith.constant 0 : index
    %c0_22 = arith.constant 0 : index
    %17 = vector.load %arg3[%c0_21, %c0_22] : memref<32x32xbf16, #tpu.memory_space<vmem>>, vector<32x32xbf16>
    %cst = arith.constant dense<0.000000e+00> : vector<64x32xf32>
    %18 = tpu.matmul %16, %17, %cst {dimension_numbers = #tpu.dot_dimension_numbers<[1], [0], [0], [1], [0, 0, 1, 1], [], []>} : vector<64x32xbf16>, vector<32x32xbf16>, vector<64x32xf32> -> vector<64x32xf32>
    %c0_23 = arith.constant 0 : index
    %c0_24 = arith.constant 0 : index
    %19 = vector.load %arg4[%c0_23, %c0_24] : memref<1x32xf32, #tpu.memory_space<vmem>>, vector<1x32xf32>
    %20 = vector.broadcast %19 : vector<1x32xf32> to vector<64x32xf32>
    %21 = arith.addf %18, %20 : vector<64x32xf32>
    %22 = arith.truncf %21 : vector<64x32xf32> to vector<64x32xbf16>
    %c0_25 = arith.constant 0 : index
    %c0_26 = arith.constant 0 : index
    %c0_27 = arith.constant 0 : index
    %23 = vector.load %arg5[%c0_25, %c0_26, %c0_27] : memref<1x64x32xbf16, #tpu.memory_space<vmem>>, vector<1x64x32xbf16>
    %24 = vector.shape_cast %23 : vector<1x64x32xbf16> to vector<64x32xbf16>
    %25 = vector.shape_cast %22 : vector<64x32xbf16> to vector<1x64x32xbf16>
    tpu.vector_store %arg5[%c0_25, %c0_26, %c0_27], %25 {strides = array<i32>} : memref<1x64x32xbf16, #tpu.memory_space<vmem>>, vector<1x64x32xbf16>,
    %cst_28 = arith.constant dense<0.000000e+00> : vector<32xf32>
    %26 = vector.multi_reduction <add>, %21, %cst_28 [0] : vector<64x32xf32> to vector<32xf32>
    %27 = vector.shape_cast %26 : vector<32xf32> to vector<1x32xf32>
    %c0_29 = arith.constant 0 : index
    %c0_30 = arith.constant 0 : index
    %c0_31 = arith.constant 0 : index
    %c0_32 = arith.constant 0 : index
    %28 = vector.load %arg6[%c0_29, %c0_30, %c0_31, %c0_32] : memref<1x1x2x32xf32, #tpu.memory_space<vmem>>, vector<1x1x1x32xf32>
    %29 = vector.shape_cast %28 : vector<1x1x1x32xf32> to vector<1x32xf32>
    %30 = vector.shape_cast %27 : vector<1x32xf32> to vector<1x1x1x32xf32>
    tpu.vector_store %arg6[%c0_29, %c0_30, %c0_31, %c0_32], %30 {strides = array<i32>} : memref<1x1x2x32xf32, #tpu.memory_space<vmem>>, vector<1x1x1x32xf32>,
    %31 = arith.mulf %21, %21 : vector<64x32xf32>
    %cst_33 = arith.constant dense<0.000000e+00> : vector<32xf32>
    %32 = vector.multi_reduction <add>, %31, %cst_33 [0] : vector<64x32xf32> to vector<32xf32>
    %33 = vector.shape_cast %32 : vector<32xf32> to vector<1x32xf32>
    %c0_34 = arith.constant 0 : index
    %c0_35 = arith.constant 0 : index
    %c1_36 = arith.constant 1 : index
    %c0_37 = arith.constant 0 : index
    %34 = vector.load %arg6[%c0_34, %c0_35, %c1_36, %c0_37] : memref<1x1x2x32xf32, #tpu.memory_space<vmem>>, vector<1x1x1x32xf32>
    %35 = vector.shape_cast %34 : vector<1x1x1x32xf32> to vector<1x32xf32>
    %36 = vector.shape_cast %33 : vector<1x32xf32> to vector<1x1x1x32xf32>
    tpu.vector_store %arg6[%c0_34, %c0_35, %c1_36, %c0_37], %36 {strides = array<i32>} : memref<1x1x2x32xf32, #tpu.memory_space<vmem>>, vector<1x1x1x32xf32>,
    return
  }
  func.func @transform_0(%arg0: i32, %arg1: i32) -> (i32, i32, i32, i32) {
    %c0_i32 = arith.constant 0 : i32
    %c0_i32_0 = arith.constant 0 : i32
    %c0_i32_1 = arith.constant 0 : i32
    %c0_i32_2 = arith.constant 0 : i32
    return %arg0, %c0_i32, %c0_i32_0, %c0_i32_1 : i32, i32, i32, i32
  }
  func.func @transform_1(%arg0: i32, %arg1: i32) -> (i32, i32) {
    %c0_i32 = arith.constant 0 : i32
    %c0_i32_0 = arith.constant 0 : i32
    %c0_i32_1 = arith.constant 0 : i32
    return %c0_i32, %c0_i32_0 : i32, i32
  }
  func.func @transform_2(%arg0: i32, %arg1: i32) -> (i32, i32) {
    %c0_i32 = arith.constant 0 : i32
    %c0_i32_0 = arith.constant 0 : i32
    %c0_i32_1 = arith.constant 0 : i32
    return %c0_i32, %c0_i32_0 : i32, i32
  }
  func.func @transform_3(%arg0: i32, %arg1: i32) -> (i32, i32, i32) {
    %c0_i32 = arith.constant 0 : i32
    %c0_i32_0 = arith.constant 0 : i32
    return %arg0, %arg1, %c0_i32 : i32, i32, i32
  }
  func.func @transform_4(%arg0: i32, %arg1: i32) -> (i32, i32, i32, i32) {
    %c0_i32 = arith.constant 0 : i32
    %c0_i32_0 = arith.constant 0 : i32
    %c0_i32_1 = arith.constant 0 : i32
    return %arg0, %arg1, %c0_i32, %c0_i32_0 : i32, i32, i32, i32
  }
}

module attributes {stable_mosaic.version = 11 : i64} {
  func.func @bn_act_kernel(%arg0: i32, %arg1: memref<16x256xbf16, #tpu.memory_space<vmem>>, %arg2: memref<1x256xf32, #tpu.memory_space<vmem>>, %arg3: memref<1x256xf32, #tpu.memory_space<vmem>>, %arg4: memref<16x256xf32, #tpu.memory_space<vmem>>) attributes {dimension_semantics = [#tpu.dimension_semantics<parallel>], iteration_bounds = array<i64: 1>, scalar_prefetch = 0 : i64, scratch_operands = 0 : i64, tpu.core_type = #tpu.core_type<tc>, window_params = [{transform_indices = @transform_0, window_bounds = array<i64: 16, 256>}, {pipeline_mode = #tpu.pipeline_mode<synchronous>, transform_indices = @transform_1, window_bounds = array<i64: 1, 256>}, {pipeline_mode = #tpu.pipeline_mode<synchronous>, transform_indices = @transform_2, window_bounds = array<i64: 1, 256>}, {transform_indices = @transform_3, window_bounds = array<i64: 16, 256>}]} {
    %c0 = arith.constant 0 : index
    %c0_0 = arith.constant 0 : index
    %0 = vector.load %arg1[%c0, %c0_0] : memref<16x256xbf16, #tpu.memory_space<vmem>>, vector<16x256xbf16>
    %1 = arith.extf %0 : vector<16x256xbf16> to vector<16x256xf32>
    %c0_1 = arith.constant 0 : index
    %c0_2 = arith.constant 0 : index
    %2 = vector.load %arg2[%c0_1, %c0_2] : memref<1x256xf32, #tpu.memory_space<vmem>>, vector<1x256xf32>
    %3 = vector.broadcast %2 : vector<1x256xf32> to vector<16x256xf32>
    %4 = arith.mulf %1, %3 : vector<16x256xf32>
    %c0_3 = arith.constant 0 : index
    %c0_4 = arith.constant 0 : index
    %5 = vector.load %arg3[%c0_3, %c0_4] : memref<1x256xf32, #tpu.memory_space<vmem>>, vector<1x256xf32>
    %6 = vector.broadcast %5 : vector<1x256xf32> to vector<16x256xf32>
    %7 = arith.addf %4, %6 : vector<16x256xf32>
    %cst = arith.constant 0.000000e+00 : f32
    %8 = vector.broadcast %cst : f32 to vector<16x256xf32>
    %9 = arith.cmpf oge, %7, %8 : vector<16x256xf32>
    %cst_5 = arith.constant 0.00999999977 : f32
    %10 = vector.broadcast %cst_5 : f32 to vector<16x256xf32>
    %11 = arith.mulf %10, %7 : vector<16x256xf32>
    %12 = arith.select %9, %7, %11 : vector<16x256xi1>, vector<16x256xf32>
    %c0_6 = arith.constant 0 : index
    %c0_7 = arith.constant 0 : index
    %13 = vector.load %arg4[%c0_6, %c0_7] : memref<16x256xf32, #tpu.memory_space<vmem>>, vector<16x256xf32>
    tpu.vector_store %arg4[%c0_6, %c0_7], %12 {strides = array<i32>} : memref<16x256xf32, #tpu.memory_space<vmem>>, vector<16x256xf32>,
    return
  }
  func.func @transform_0(%arg0: i32) -> (i32, i32) {
    %c0_i32 = arith.constant 0 : i32
    %c0_i32_0 = arith.constant 0 : i32
    return %arg0, %c0_i32 : i32, i32
  }
  func.func @transform_1(%arg0: i32) -> (i32, i32) {
    %c0_i32 = arith.constant 0 : i32
    %c0_i32_0 = arith.constant 0 : i32
    %c0_i32_1 = arith.constant 0 : i32
    return %c0_i32, %c0_i32_0 : i32, i32
  }
  func.func @transform_2(%arg0: i32) -> (i32, i32) {
    %c0_i32 = arith.constant 0 : i32
    %c0_i32_0 = arith.constant 0 : i32
    %c0_i32_1 = arith.constant 0 : i32
    return %c0_i32, %c0_i32_0 : i32, i32
  }
  func.func @transform_3(%arg0: i32) -> (i32, i32) {
    %c0_i32 = arith.constant 0 : i32
    %c0_i32_0 = arith.constant 0 : i32
    return %arg0, %c0_i32 : i32, i32
  }
}

</mosaic_0001>

<llo_original>
// kernel: tile.26
$region0: #{tile.26}
  #allocation0 [shape = 's32[1]{0}', space=sflag, size = 0x4, scoped, tag = 'scoped memory for tile.26']
  %s0 = inlined_call_operand.vmem [shape: f32[8], index: 0, kind: input, shape index: {}]
  %s1 = inlined_call_operand.vmem [shape: f32[4,8], index: 1, kind: output, shape index: {}]
  // Predicated region
  $region2: #{tile.26} parent=0 // pred_check
    _
  $region3: #{tile.26} parent=0 // pred_check_branch
    %3 = sbr.rel (0) target = $region5
  $region4: #{tile.26} parent=0 // pred_region
    _
  $region5: #{tile.26} parent=0 // pred_fallthru
    _
  %v4 = vld [vmem:[%s0] ss:$0 sm:$0xff]
  %5 = vst [vmem:[%s1] sm:$0xf] %v4

// kernel: tile.27
$region0: #{tile.27}
  %s0 = inlined_call_operand.vmem [shape: f32[4,8], index: 0, kind: input, shape index: {}]
  %s1 = inlined_call_operand.hbm [shape: f32[1,32], index: 1, kind: output, shape index: {}]
  $region1: #{tile.27} parent=0
    #allocation0 [shape = 'u8[512]{0}', space=vmem, size = 0x400, scoped, tag = 'operand span for operand 1']
    #allocation1 [shape = 's32[1]{0}', space=sflag, size = 0x4, scoped, tag = 'scoped memory for tile.27']
    #allocation2 [shape = 'u8[4096]{0}', space=vmem, size = 0x1000, scoped, tag = 'scoped mem for output reshape']
    #allocation3 [shape = 'u8[4096]{0}', space=vmem, size = 0x1000, scoped, tag = 'scoped mem for input reshape']
    %2 = vsyncpa [#allocation1], 0
    %s4 = sshllo.u32 0, 4
    %v5 = vld [vmem:[%s0] sm:%s4]
    %6 = vst [vmem:[#allocation3] sm:%s4] %v5
    %v7 = vld [vmem:[#allocation3] sm:$0x1]
    %vm8 = vcmask 64512
    %9 = vst.msk [vmem:[#allocation2] sm:$0x1] %vm8, %v7
    %s10 = scalar_lea.vmem [#allocation3], 3
    %v11 = vld [vmem:[%s10] sm:$0x1]
    %12 = vrot.lane.b32.xlu0 %v11, 24
    %v13 = vpop.permute.xlu0 %12
    %vm14 = vcmask 261312
    %15 = vst.msk [vmem:[#allocation2] sm:$0x1] %vm14, %v13
    %s16 = scalar_lea.vmem [#allocation3], 2
    %v17 = vld [vmem:[%s16] sm:$0x1]
    %18 = vrot.lane.b32.xlu0 %v17, 16
    %v19 = vpop.permute.xlu0 %18
    %vm20 = vcmask 195712
    %21 = vst.msk [vmem:[#allocation2] sm:$0x1] %vm20, %v19
    %s22 = scalar_lea.vmem [#allocation3], 1
    %v23 = vld [vmem:[%s22] sm:$0x1]
    %24 = vrot.lane.b32.xlu0 %v23, 8
    %v25 = vpop.permute.xlu0 %24
    %vm26 = vcmask 130112
    %27 = vst.msk [vmem:[#allocation2] sm:$0x1] %vm26, %v25
    %s29 = sshllo.u32 0, 1
    %v31 = vld [vmem:[#allocation2] sm:%s29]
    %s32 = sshllo.u32 0, 1
    %33 = vst [vmem:[#allocation0] sm:%s32] %v31
    %s35 = ssub.s32 16, 16
    %36 = vsyncadd [#allocation1], %s35
    %s38 = sshll.u32 [#allocation0], 4
    %s39 = int_to_ptr.vmem [resolvable:$true] %s38
    %41 = dma.vmem_to_hbm [thread:$0]  %s39, 16, %s1, [#allocation1]
    %42 = dma.done [#allocation1], 16
    %43 = vsyncpa [#allocation1], 1

// kernel: tile.38
$region0: #{tile.38}
  %s0 = inlined_call_operand.vmem [shape: f32[4,8], index: 0, kind: input, shape index: {}]
  %s1 = inlined_call_operand.vmem [shape: f32[32], index: 1, kind: output, shape index: {}]
  $region1: #{tile.38} parent=0
    #allocation0 [shape = 'u8[4096]{0}', space=vmem, size = 0x1000, scoped, tag = 'scoped mem for output reshape']
    #allocation1 [shape = 'u8[4096]{0}', space=vmem, size = 0x1000, scoped, tag = 'scoped mem for input reshape']
    %s3 = sshllo.u32 0, 4
    %v4 = vld [vmem:[%s0] sm:%s3]
    %5 = vst [vmem:[#allocation1] sm:%s3] %v4
    %v6 = vld [vmem:[#allocation1] sm:$0x1]
    %vm7 = vcmask 64512
    %8 = vst.msk [vmem:[#allocation0] sm:$0x1] %vm7, %v6
    %s9 = scalar_lea.vmem [#allocation1], 3
    %v10 = vld [vmem:[%s9] sm:$0x1]
    %11 = vrot.lane.b32.xlu0 %v10, 24
    %v12 = vpop.permute.xlu0 %11
    %vm13 = vcmask 261312
    %14 = vst.msk [vmem:[#allocation0] sm:$0x1] %vm13, %v12
    %s15 = scalar_lea.vmem [#allocation1], 2
    %v16 = vld [vmem:[%s15] sm:$0x1]
    %17 = vrot.lane.b32.xlu0 %v16, 16
    %v18 = vpop.permute.xlu0 %17
    %vm19 = vcmask 195712
    %20 = vst.msk [vmem:[#allocation0] sm:$0x1] %vm19, %v18
    %s21 = scalar_lea.vmem [#allocation1], 1
    %v22 = vld [vmem:[%s21] sm:$0x1]
    %23 = vrot.lane.b32.xlu0 %v22, 8
    %v24 = vpop.permute.xlu0 %23
    %vm25 = vcmask 130112
    %26 = vst.msk [vmem:[#allocation0] sm:$0x1] %vm25, %v24
    %s28 = sshllo.u32 0, 1
    %v30 = vld [vmem:[#allocation0] sm:%s28]
    %s31 = sshllo.u32 0, 1
    %32 = vst [vmem:[%s1] sm:%s31] %v30

// kernel: tile.44
$region0: #{tile.44}
  #allocation0 [shape = 's32[1]{0}', space=sflag, size = 0x4, scoped, tag = 'scoped memory for tile.44']
  %s0 = inlined_call_operand.vmem [shape: f32[32], index: 0, kind: input, shape index: {}]
  %s1 = inlined_call_operand.vmem [shape: f32[8,32], index: 1, kind: output, shape index: {}]
  // Predicated region
  $region2: #{tile.44} parent=0 // pred_check
    _
  $region3: #{tile.44} parent=0 // pred_check_branch
    %3 = sbr.rel (0) target = $region5
  $region4: #{tile.44} parent=0 // pred_region
    _
  $region5: #{tile.44} parent=0 // pred_fallthru
    _
  %v4 = vld [vmem:[%s0] ss:$0 sm:$0xff]
  %5 = vst [vmem:[%s1] sm:$0xff] %v4

// kernel: tile.45
$region0: #{tile.45}
  %s0 = inlined_call_operand.vmem [shape: f32[8,32], index: 0, kind: input, shape index: {}]
  %s1 = inlined_call_operand.hbm [shape: f32[1,256], index: 1, kind: output, shape index: {}]
  $region1: #{tile.45} parent=0
    #allocation0 [shape = 'u8[1024]{0}', space=vmem, size = 0x400, scoped, tag = 'operand span for operand 1']
    #allocation1 [shape = 's32[1]{0}', space=sflag, size = 0x4, scoped, tag = 'scoped memory for tile.45']
    #allocation2 [shape = 'u8[8192]{0}', space=vmem, size = 0x2000, scoped, tag = 'scoped mem for output reshape']
    %2 = vsyncpa [#allocation1], 0
    %s3 = smov 3
    %v4 = vld [vmem:[%s0] ss:$4 sm:%s3]
    %vm5 = vcmask 261120
    %6 = vst.msk [vmem:[#allocation2] ss:$8 sm:$0x3] %vm5, %v4
    %s7 = scalar_lea.vmem %s0, 3
    %s8 = smov 3
    %v9 = vld [vmem:[%s7] ss:$4 sm:%s8]
    %10 = vrot.lane.b32.xlu0 %v9, 96
    %v11 = vpop.permute.xlu0 %10
    %vm12 = vcmask 1048320
    %13 = vst.msk [vmem:[#allocation2] ss:$8 sm:$0x3] %vm12, %v11
    %s14 = scalar_lea.vmem %s0, 2
    %s15 = smov 3
    %v16 = vld [vmem:[%s14] ss:$4 sm:%s15]
    %17 = vrot.lane.b32.xlu0 %v16, 64
    %v18 = vpop.permute.xlu0 %17
    %vm19 = vcmask 785920
    %20 = vst.msk [vmem:[#allocation2] ss:$8 sm:$0x3] %vm19, %v18
    %s21 = scalar_lea.vmem %s0, 1
    %s22 = smov 3
    %v23 = vld [vmem:[%s21] ss:$4 sm:%s22]
    %24 = vrot.lane.b32.xlu0 %v23, 32
    %v25 = vpop.permute.xlu0 %24
    %vm26 = vcmask 523520
    %27 = vst.msk [vmem:[#allocation2] ss:$8 sm:$0x3] %vm26, %v25
    %s29 = sshllo.u32 0, 1
    %v31 = vld [vmem:[#allocation2] sm:%s29]
    %s32 = sshllo.u32 0, 1
    %33 = vst [vmem:[#allocation0] sm:%s32] %v31
    %s34 = scalar_lea.vmem [#allocation2], 8
    %v35 = vld [vmem:[%s34] sm:%s29]
    %s36 = sshllo.u32 0, 1
    %s37 = scalar_lea.vmem [#allocation0], 1
    %38 = vst [vmem:[%s37] sm:%s36] %v35
    %s40 = ssub.s32 32, 32
    %41 = vsyncadd [#allocation1], %s40
    %s43 = sshll.u32 [#allocation0], 4
    %s44 = int_to_ptr.vmem [resolvable:$true] %s43
    %46 = dma.vmem_to_hbm [thread:$0]  %s44, 32, %s1, [#allocation1]
    %47 = dma.done [#allocation1], 32
    %48 = vsyncpa [#allocation1], 1

// kernel: complex_decoder_forward.3
$region0: #{complex_decoder_forward.3}
  #allocation0 [shape = 'u32[]', space=smem, size = 0x4, offset = 0x4, fixed_abs, tag = 'smem constant byte address 0x4 - core index']
  #allocation1 [shape = 'u32[144,128]{1,0:T(1,128)}', space=vmem, size = 0x12000, scoped, tag = 'internal scratch']
  %s0 = inlined_call_operand.hbm [shape: bf16[16,256], index: 0, kind: input, shape index: {}]
  %s1 = inlined_call_operand.hbm [shape: f32[1,256], index: 1, kind: input, shape index: {}]
  %s2 = inlined_call_operand.hbm [shape: f32[1,256], index: 2, kind: input, shape index: {}]
  %s3 = inlined_call_operand.hbm [shape: f32[16,256], index: 3, kind: output, shape index: {}]
  %s4 = sld [smem:[#allocation0]]
  $region34: #{complex_decoder_forward.3} parent=0
    _
  %s6 = ssub.s32 1, %s4
  %s7 = scalar_select 0, %s6, %s4
  $region1: #{complex_decoder_forward.3} parent=0
    #allocation2 [shape = 'u8[8192]{0}', space=vmem, size = 0x2000, scoped, tag = 'input window, operand 0, single buffered']
    #allocation3 [shape = 's32[1]{0}', space=sflag, size = 0x4, scoped, tag = 'scoped memory for complex_decoder_forward.3']
    #allocation4 [shape = 's32[1]{0}', space=sflag, size = 0x4, scoped, tag = 'scoped memory for complex_decoder_forward.3']
    #allocation5 [shape = 'u8[1024]{0}', space=vmem, size = 0x400, scoped, tag = 'input window, operand 1, single buffered']
    #allocation6 [shape = 's32[1]{0}', space=sflag, size = 0x4, scoped, tag = 'scoped memory for complex_decoder_forward.3']
    #allocation7 [shape = 'u8[1024]{0}', space=vmem, size = 0x400, scoped, tag = 'input window, operand 2, single buffered']
    #allocation8 [shape = 'u8[16384]{0}', space=vmem, size = 0x4000, scoped, tag = 'output window, operand 0, single buffered']
    %8 = vsyncpa [#allocation3], 0
    %9 = vsyncpa [#allocation6], 0
    %10 = vsyncpa [#allocation4], 0
    // Predicated region
    $region2: #{complex_decoder_forward.3} parent=1 // pred_check
      _
    $region3: #{complex_decoder_forward.3} parent=1 // pred_check_branch
      %12 = sbr.rel (0) target = $region5
    $region4: #{complex_decoder_forward.3} parent=1 // pred_region
      %s14 = ssub.s32 256, 256
      %15 = vsyncadd [#allocation3], %s14
      %s16 = sshll.u32 [#allocation2], 4
      %s17 = int_to_ptr.vmem [resolvable:$true] %s16
      %22 = dma.hbm_to_vmem [thread:$0]  %s0, 256, %s17, [#allocation3], 128, 128, 8
    $region5: #{complex_decoder_forward.3} parent=1 // pred_fallthru
      _
    // Predicated region
    $region6: #{complex_decoder_forward.3} parent=1 // pred_check
      _
    $region7: #{complex_decoder_forward.3} parent=1 // pred_check_branch
      %24 = sbr.rel (0) target = $region9
    $region8: #{complex_decoder_forward.3} parent=1 // pred_region
      %s26 = ssub.s32 32, 32
      %27 = vsyncadd [#allocation6], %s26
      %s29 = sshll.u32 [#allocation5], 4
      %s30 = int_to_ptr.vmem [resolvable:$true] %s29
      %32 = dma.hbm_to_vmem [thread:$0]  %s1, 32, %s30, [#allocation6]
    $region9: #{complex_decoder_forward.3} parent=1 // pred_fallthru
      _
    // Predicated region
    $region10: #{complex_decoder_forward.3} parent=1 // pred_check
      _
    $region11: #{complex_decoder_forward.3} parent=1 // pred_check_branch
      %34 = sbr.rel (0) target = $region13
    $region12: #{complex_decoder_forward.3} parent=1 // pred_region
      %s36 = ssub.s32 32, 32
      %37 = vsyncadd [#allocation6], %s36
      %s39 = sshll.u32 [#allocation7], 4
      %s40 = int_to_ptr.vmem [resolvable:$true] %s39
      %42 = dma.hbm_to_vmem [thread:$0]  %s2, 32, %s40, [#allocation6]
    $region13: #{complex_decoder_forward.3} parent=1 // pred_fallthru
      _
    // Predicated region
    $region14: #{complex_decoder_forward.3} parent=1 // pred_check
      _
    $region15: #{complex_decoder_forward.3} parent=1 // pred_check_branch
      %44 = sbr.rel (0) target = $region17
    $region16: #{complex_decoder_forward.3} parent=1 // pred_region
      %45 = dma.done [#allocation3], 256
    $region17: #{complex_decoder_forward.3} parent=1 // pred_fallthru
      _
    // Predicated region
    $region18: #{complex_decoder_forward.3} parent=1 // pred_check
      _
    $region19: #{complex_decoder_forward.3} parent=1 // pred_check_branch
      %47 = sbr.rel (0) target = $region21
    $region20: #{complex_decoder_forward.3} parent=1 // pred_region
      %48 = dma.done [#allocation6], 32
    $region21: #{complex_decoder_forward.3} parent=1 // pred_fallthru
      _
    // Predicated region
    $region22: #{complex_decoder_forward.3} parent=1 // pred_check
      _
    $region23: #{complex_decoder_forward.3} parent=1 // pred_check_branch
      %50 = sbr.rel (0) target = $region25
    $region24: #{complex_decoder_forward.3} parent=1 // pred_region
      %51 = dma.done [#allocation6], 32
    $region25: #{complex_decoder_forward.3} parent=1 // pred_fallthru
      _
    %v52 = vld [vmem:[#allocation2] sm:$0xff]
    %v53 = vld [vmem:[#allocation2 + $0x8] sm:$0xff]
    %v54 = vunpack.c.l.bf16 %v52
    %v55 = vunpack.c.h.bf16 %v52
    %v56 = vunpack.c.l.bf16 %v53
    %v57 = vunpack.c.h.bf16 %v53
    %v58 = vld [vmem:[#allocation5] sm:$0x3]
    %v60 = vlaneseq
    %v61 = vshrl.u32 %v60, 7
    %v62 = vsub.s32 0, %v61
    %v63 = vrot.slane %v58, %v62
    %v64 = vlaneseq
    %v65 = vshrl.u32 %v64, 7
    %v66 = vsub.s32 1, %v65
    %v67 = vrot.slane %v58, %v66
    %v70 = vmul.f32 %v54, %v63
    %v71 = vmul.f32 %v55, %v67
    %v72 = vmul.f32 %v56, %v63
    %v73 = vmul.f32 %v57, %v67
    %v74 = vld [vmem:[#allocation7] sm:$0x3]
    %v76 = vlaneseq
    %v77 = vshrl.u32 %v76, 7
    %v78 = vsub.s32 0, %v77
    %v79 = vrot.slane %v74, %v78
    %v80 = vlaneseq
    %v81 = vshrl.u32 %v80, 7
    %v82 = vsub.s32 1, %v81
    %v83 = vrot.slane %v74, %v82
    %v86 = vadd.f32 %v70, %v79
    %v87 = vadd.f32 %v71, %v83
    %v88 = vadd.f32 %v72, %v79
    %v89 = vadd.f32 %v73, %v83
    %vm90 = vcmp.ge.f32.partialorder %v86, 0.0
    %vm91 = vcmp.ge.f32.partialorder %v87, 0.0
    %vm92 = vcmp.ge.f32.partialorder %v88, 0.0
    %vm93 = vcmp.ge.f32.partialorder %v89, 0.0
    %v94 = vmul.f32 %v86, 0.01
    %v95 = vmul.f32 %v87, 0.01
    %v96 = vmul.f32 %v88, 0.01
    %v97 = vmul.f32 %v89, 0.01
    %v98 = vsel %vm90, %v86, %v94
    %v99 = vsel %vm91, %v87, %v95
    %v100 = vsel %vm92, %v88, %v96
    %v101 = vsel %vm93, %v89, %v97
    %102 = vst [vmem:[#allocation8] sm:$0xff] %v98
    %103 = vst [vmem:[#allocation8 + $0x8] sm:$0xff] %v99
    %104 = vst [vmem:[#allocation8 + $0x10] sm:$0xff] %v100
    %105 = vst [vmem:[#allocation8 + $0x18] sm:$0xff] %v101
    // Predicated region
    $region26: #{complex_decoder_forward.3} parent=1 // pred_check
      _
    $region27: #{complex_decoder_forward.3} parent=1 // pred_check_branch
      %107 = sbr.rel (0) target = $region29
    $region28: #{complex_decoder_forward.3} parent=1 // pred_region
      %s109 = ssub.s32 512, 512
      %110 = vsyncadd [#allocation4], %s109
      %s111 = sshll.u32 [#allocation8], 4
      %s112 = int_to_ptr.vmem [resolvable:$true] %s111
      %117 = dma.vmem_to_hbm [thread:$0]  %s112, 512, %s3, [#allocation4], 256, 256, 16
    $region29: #{complex_decoder_forward.3} parent=1 // pred_fallthru
      _
    // Predicated region
    $region30: #{complex_decoder_forward.3} parent=1 // pred_check
      _
    $region31: #{complex_decoder_forward.3} parent=1 // pred_check_branch
      %119 = sbr.rel (0) target = $region33
    $region32: #{complex_decoder_forward.3} parent=1 // pred_region
      %120 = dma.done [#allocation4], 512
    $region33: #{complex_decoder_forward.3} parent=1 // pred_fallthru
      _
    %121 = vsyncpa [#allocation3], 1
    %122 = vsyncpa [#allocation6], 1
    %123 = vsyncpa [#allocation4], 1

// kernel: complex_decoder_forward.2
$region0: #{complex_decoder_forward.2}
  #allocation0 [shape = 'u32[]', space=smem, size = 0x4, offset = 0x4, fixed_abs, tag = 'smem constant byte address 0x4 - core index']
  #allocation1 [shape = 'u32[144,128]{1,0:T(1,128)}', space=vmem, size = 0x12000, scoped, tag = 'internal scratch']
  #allocation2 [shape = 'bf16[64,32]{1,0:T(16,128)(2,1)}', space=vmem, size = 0x4000, scoped, tag = 'scratch operand']
  %s0 = inlined_call_operand.hbm [shape: bf16[2,9,9,8], index: 0, kind: input, shape index: {}]
  %s1 = inlined_call_operand.hbm [shape: bf16[32,32], index: 1, kind: input, shape index: {}]
  %s2 = inlined_call_operand.hbm [shape: f32[1,32], index: 2, kind: input, shape index: {}]
  %s3 = inlined_call_operand.hbm [shape: bf16[2,64,32], index: 3, kind: output, shape index: {0}]
  %s4 = inlined_call_operand.hbm [shape: f32[2,1,2,32], index: 4, kind: output, shape index: {1}]
  %5 = xla_tuple %s3, %s4
  %s6 = sld [smem:[#allocation0]]
  $region65: #{complex_decoder_forward.2} parent=0
    _
  %s8 = ssub.s32 1, %s6
  %s9 = scalar_select 0, %s8, %s6
  $region1: #{complex_decoder_forward.2} parent=0
    #allocation3 [shape = 'u8[73728]{0}', space=vmem, size = 0x12000, scoped, tag = 'input window, operand 0']
    #allocation4 [shape = 's32[2]{0}', space=sflag, size = 0x8, scoped, tag = 'scoped memory for complex_decoder_forward.2']
    #allocation5 [shape = 's32[2]{0}', space=sflag, size = 0x8, scoped, tag = 'scoped memory for complex_decoder_forward.2']
    #allocation6 [shape = 'u8[8192]{0}', space=vmem, size = 0x2000, scoped, tag = 'input window, operand 1, single buffered']
    #allocation7 [shape = 's32[1]{0}', space=sflag, size = 0x4, scoped, tag = 'scoped memory for complex_decoder_forward.2']
    #allocation8 [shape = 'u8[512]{0}', space=vmem, size = 0x400, scoped, tag = 'input window, operand 2, single buffered']
    #allocation9 [shape = 'u8[32768]{0}', space=vmem, size = 0x8000, scoped, tag = 'output window, operand 0']
    #allocation10 [shape = 'u8[2048]{0}', space=vmem, size = 0x800, scoped, tag = 'output window, operand 1']
    #allocation11 [shape = 's32[2]{0}', space=sflag, size = 0x8, scoped, tag = 'scoped memory for complex_decoder_forward.2']
    %10 = vsyncpa [#allocation4], 0
    %s11 = scalar_lea.sflag [#allocation4], 1
    %12 = vsyncpa %s11, 0
    %13 = vsyncpa [#allocation7], 0
    %14 = vsyncpa [#allocation5], 0
    %s15 = scalar_lea.sflag [#allocation5], 1
    %16 = vsyncpa %s15, 0
    %17 = vsyncpa [#allocation11], 0
    %s18 = scalar_lea.sflag [#allocation11], 1
    %19 = vsyncpa %s18, 0
    loop: start=0, step=1, limit=4
    $region2: #{complex_decoder_forward.2} parent=1 // loop_pre_header
      _
    $region3: #{complex_decoder_forward.2} parent=1 // loop_header
      %s21 = sphi 0, %s25
      %p22 = scmp.ge.s32.totalorder %s21, 4
      %s28 = sphi 0, %s40
      %s29 = sphi 0, %s36
      %s30 = sphi 0, %s28
      %s31 = sphi 0, %s29
      %s32 = sphi 0, %s30
      %s33 = sphi 0, %s31
      %s43 = sphi 0, %s45
      %s46 = sphi 0, %s43
      %s47 = sphi 0, %s46
      %s63 = sphi 0, %s47
      %s67 = sphi 0, %s67
      %s69 = sphi 0, %s67
      %s70 = sphi 0, %s69
      %s84 = sphi 0, %s70
      %s88 = sphi 0, %s88
      %s90 = sphi 0, %s88
      %s91 = sphi 0, %s90
      %s105 = sphi 0, %s91
      %s113 = sphi 0, %s115
      %s116 = sphi 0, %s113
      %s117 = sphi 0, %s116
      %s133 = sphi 0, %s117
      %s141 = sphi 0, %s143
      %s144 = sphi 0, %s141
      %s145 = sphi 0, %s144
      %s161 = sphi 0, %s145
    $region4: #{complex_decoder_forward.2} parent=1 // loop_header_branch
      %24 = sbr.rel (%p22) target = $region8
    $region5: #{complex_decoder_forward.2} parent=1 // loop_body
      %s26 = ssub.s32 %s21, 1
      %s27 = ssub.s32 %s21, 2
      %s34 = sadd.s32 1, %s29
      %p35 = scmp.ge.s32.totalorder %s34, 1
      %s36 = scalar_select %p35, 0, %s34
      %s37 = sadd.s32 1, %s28
      %s38 = scalar_select %p35, %s37, %s28
      %p39 = scmp.ge.s32.totalorder %s38, 2
      %s40 = scalar_select %p39, 0, %s38
      %s41 = ssub.s32 %s28, %s40
      %p42 = scmp.eq.s32.totalorder %s41, 0
      %s44 = sadd.s32 %s43, 1
      %s45 = scalar_select %p42, %s43, %s44
      %p48 = pneg %p42
      %p49 = scmp.eq.s32.totalorder %s21, 1
      %p50 = por %p48, %p49
      %p51 = scmp.ne.s32.totalorder %s43, %s46
      %p52 = scmp.eq.s32.totalorder %s21, 0
      %p53 = por %p51, %p52
      %p54 = scmp.ne.s32.totalorder %s43, %s46
      %p55 = scmp.eq.s32.totalorder %s26, 1
      %p56 = por %p54, %p55
      %p57 = scmp.ne.s32.totalorder %s46, %s47
      %p58 = scmp.eq.s32.totalorder %s26, 0
      %p59 = por %p57, %p58
      %p60 = scmp.ne.s32.totalorder %s46, %s47
      %p61 = scmp.eq.s32.totalorder %s27, 1
      %p62 = por %p60, %p61
      %p64 = scmp.ne.s32.totalorder %s47, %s63
      %p65 = scmp.eq.s32.totalorder %s27, 0
      %p66 = por %p64, %p65
      %s68 = sadd.s32 %s67, 1
      %p71 = scmp.eq.s32.totalorder %s21, 1
      %p72 = scmp.ne.s32.totalorder %s67, %s69
      %p73 = scmp.eq.s32.totalorder %s21, 0
      %p74 = por %p72, %p73
      %p75 = scmp.ne.s32.totalorder %s67, %s69
      %p76 = scmp.eq.s32.totalorder %s26, 1
      %p77 = por %p75, %p76
      %p78 = scmp.ne.s32.totalorder %s69, %s70
      %p79 = scmp.eq.s32.totalorder %s26, 0
      %p80 = por %p78, %p79
      %p81 = scmp.ne.s32.totalorder %s69, %s70
      %p82 = scmp.eq.s32.totalorder %s27, 1
      %p83 = por %p81, %p82
      %p85 = scmp.ne.s32.totalorder %s70, %s84
      %p86 = scmp.eq.s32.totalorder %s27, 0
      %p87 = por %p85, %p86
      %s89 = sadd.s32 %s88, 1
      %p92 = scmp.eq.s32.totalorder %s21, 1
      %p93 = scmp.ne.s32.totalorder %s88, %s90
      %p94 = scmp.eq.s32.totalorder %s21, 0
      %p95 = por %p93, %p94
      %p96 = scmp.ne.s32.totalorder %s88, %s90
      %p97 = scmp.eq.s32.totalorder %s26, 1
      %p98 = por %p96, %p97
      %p99 = scmp.ne.s32.totalorder %s90, %s91
      %p100 = scmp.eq.s32.totalorder %s26, 0
      %p101 = por %p99, %p100
      %p102 = scmp.ne.s32.totalorder %s90, %s91
      %p103 = scmp.eq.s32.totalorder %s27, 1
      %p104 = por %p102, %p103
      %p106 = scmp.ne.s32.totalorder %s91, %s105
      %p107 = scmp.eq.s32.totalorder %s27, 0
      %p108 = por %p106, %p107
      %s109 = ssub.s32 %s28, %s40
      %s110 = ssub.s32 %s29, %s36
      %s111 = sor.u32 %s109, %s110
      %p112 = scmp.eq.s32.totalorder %s111, 0
      %s114 = sadd.s32 %s113, 1
      %s115 = scalar_select %p112, %s113, %s114
      %p118 = pneg %p112
      %p119 = scmp.eq.s32.totalorder %s21, 1
      %p120 = por %p118, %p119
      %p121 = scmp.ne.s32.totalorder %s113, %s116
      %p122 = scmp.eq.s32.totalorder %s21, 0
      %p123 = por %p121, %p122
      %p124 = scmp.ne.s32.totalorder %s113, %s116
      %p125 = scmp.eq.s32.totalorder %s26, 1
      %p126 = por %p124, %p125
      %p127 = scmp.ne.s32.totalorder %s116, %s117
      %p128 = scmp.eq.s32.totalorder %s26, 0
      %p129 = por %p127, %p128
      %p130 = scmp.ne.s32.totalorder %s116, %s117
      %p131 = scmp.eq.s32.totalorder %s27, 1
      %p132 = por %p130, %p131
      %p134 = scmp.ne.s32.totalorder %s117, %s133
      %p135 = scmp.eq.s32.totalorder %s27, 0
      %p136 = por %p134, %p135
      %s137 = ssub.s32 %s28, %s40
      %s138 = ssub.s32 %s29, %s36
      %s139 = sor.u32 %s137, %s138
      %p140 = scmp.eq.s32.totalorder %s139, 0
      %s142 = sadd.s32 %s141, 1
      %s143 = scalar_select %p140, %s141, %s142
      %p146 = pneg %p140
      %p147 = scmp.eq.s32.totalorder %s21, 1
      %p148 = por %p146, %p147
      %p149 = scmp.ne.s32.totalorder %s141, %s144
      %p150 = scmp.eq.s32.totalorder %s21, 0
      %p151 = por %p149, %p150
      %p152 = scmp.ne.s32.totalorder %s141, %s144
      %p153 = scmp.eq.s32.totalorder %s26, 1
      %p154 = por %p152, %p153
      %p155 = scmp.ne.s32.totalorder %s144, %s145
      %p156 = scmp.eq.s32.totalorder %s26, 0
      %p157 = por %p155, %p156
      %p158 = scmp.ne.s32.totalorder %s144, %s145
      %p159 = scmp.eq.s32.totalorder %s27, 1
      %p160 = por %p158, %p159
      %p162 = scmp.ne.s32.totalorder %s145, %s161
      %p163 = scmp.eq.s32.totalorder %s27, 0
      %p164 = por %p162, %p163
      %p165 = scmp.le.s32.totalorder 1, %s21
      %p166 = scmp.lt.s32.totalorder %s21, 3
      %p167 = pnand %p165, %p166
      %p168 = pneg %p167
      // Predicated region
      $region9: #{complex_decoder_forward.2} parent=5 // pred_check
        _
      $region10: #{complex_decoder_forward.2} parent=5 // pred_check_branch
        %170 = sbr.rel (%p167) target = $region12
      $region11: #{complex_decoder_forward.2} parent=5 // pred_region
        %s171 = ssub.s32 %s21, 1
        // Predicated region
        $region13: #{complex_decoder_forward.2} parent=11 // pred_check
          %p172 = pneg %p80
        $region14: #{complex_decoder_forward.2} parent=11 // pred_check_branch
          %174 = sbr.rel (%p172) target = $region16
        $region15: #{complex_decoder_forward.2} parent=11 // pred_region
          %s176 = ssub.s32 256, 256
          %177 = vsyncadd [#allocation7], %s176
          %s178 = sshll.u32 [#allocation6], 4
          %s179 = int_to_ptr.vmem [resolvable:$true] %s178
          %184 = dma.hbm_to_vmem [thread:$0]  %s1, 256, %s179, [#allocation7], 64, 64, 4
        $region16: #{complex_decoder_forward.2} parent=11 // pred_fallthru
          _
        // Predicated region
        $region17: #{complex_decoder_forward.2} parent=11 // pred_check
          %p185 = pneg %p101
        $region18: #{complex_decoder_forward.2} parent=11 // pred_check_branch
          %187 = sbr.rel (%p185) target = $region20
        $region19: #{complex_decoder_forward.2} parent=11 // pred_region
          %s189 = ssub.s32 16, 16
          %190 = vsyncadd [#allocation7], %s189
          %s192 = sshll.u32 [#allocation8], 4
          %s193 = int_to_ptr.vmem [resolvable:$true] %s192
          %195 = dma.hbm_to_vmem [thread:$0]  %s2, 16, %s193, [#allocation7]
        $region20: #{complex_decoder_forward.2} parent=11 // pred_fallthru
          _
      $region12: #{complex_decoder_forward.2} parent=5 // pred_fallthru
        _
      %p196 = scmp.lt.s32.totalorder %s21, 2
      // Predicated region
      $region21: #{complex_decoder_forward.2} parent=5 // pred_check
        %p197 = pneg %p196
      $region22: #{complex_decoder_forward.2} parent=5 // pred_check_branch
        %199 = sbr.rel (%p197) target = $region24
      $region23: #{complex_decoder_forward.2} parent=5 // pred_region
        // Predicated region
        $region25: #{complex_decoder_forward.2} parent=23 // pred_check
          %p200 = pneg %p53
        $region26: #{complex_decoder_forward.2} parent=23 // pred_check_branch
          %202 = sbr.rel (%p200) target = $region28
        $region27: #{complex_decoder_forward.2} parent=23 // pred_region
          %s203 = sand.u32 %s43, 1
          %s204 = scalar_lea.sflag [#allocation4], %s203
          %s205 = sand.u32 %s43, 1
          %s206 = smul.addr %s205, 72
          %s207 = scalar_lea.vmem [#allocation3], %s206
          %s209 = ssub.s32 1152, 1152
          %210 = vsyncadd %s204, %s209
          %s211 = smul.addr %s28, 18
          %s212 = smul.addr %s211, 64
          %s213 = scalar_lea.hbm %s0, %s212
          %s214 = sshll.u32 %s207, 4
          %s215 = int_to_ptr.vmem [resolvable:$true] %s214
          %220 = dma.hbm_to_vmem [thread:$0]  %s213, 1152, %s215, %s204, 64, 64, 4
        $region28: #{complex_decoder_forward.2} parent=23 // pred_fallthru
          _
      $region24: #{complex_decoder_forward.2} parent=5 // pred_fallthru
        _
      %p221 = scmp.le.s32.totalorder 1, %s21
      %p222 = scmp.lt.s32.totalorder %s21, 3
      %p223 = pnand %p221, %p222
      %p224 = pneg %p223
      // Predicated region
      $region29: #{complex_decoder_forward.2} parent=5 // pred_check
        _
      $region30: #{complex_decoder_forward.2} parent=5 // pred_check_branch
        %226 = sbr.rel (%p223) target = $region32
      $region31: #{complex_decoder_forward.2} parent=5 // pred_region
        %s227 = ssub.s32 %s21, 1
        %s228 = sand.u32 %s46, 1
        %s229 = scalar_lea.sflag [#allocation4], %s228
        %s230 = sand.u32 %s46, 1
        %s231 = smul.addr %s230, 72
        %s232 = scalar_lea.vmem [#allocation3], %s231
        // Predicated region
        $region33: #{complex_decoder_forward.2} parent=31 // pred_check
          %p233 = pneg %p59
        $region34: #{complex_decoder_forward.2} parent=31 // pred_check_branch
          %235 = sbr.rel (%p233) target = $region36
        $region35: #{complex_decoder_forward.2} parent=31 // pred_region
          %236 = dma.done %s229, 1152
        $region36: #{complex_decoder_forward.2} parent=31 // pred_fallthru
          _
        // Predicated region
        $region37: #{complex_decoder_forward.2} parent=31 // pred_check
          %p237 = pneg %p80
        $region38: #{complex_decoder_forward.2} parent=31 // pred_check_branch
          %239 = sbr.rel (%p237) target = $region40
        $region39: #{complex_decoder_forward.2} parent=31 // pred_region
          %240 = dma.done [#allocation7], 256
        $region40: #{complex_decoder_forward.2} parent=31 // pred_fallthru
          _
        // Predicated region
        $region41: #{complex_decoder_forward.2} parent=31 // pred_check
          %p241 = pneg %p101
        $region42: #{complex_decoder_forward.2} parent=31 // pred_check_branch
          %243 = sbr.rel (%p241) target = $region44
        $region43: #{complex_decoder_forward.2} parent=31 // pred_region
          %244 = dma.done [#allocation7], 16
        $region44: #{complex_decoder_forward.2} parent=31 // pred_fallthru
          _
        %s245 = sand.u32 %s46, 1
        %s246 = scalar_lea.sflag [#allocation4], %s245
        %s247 = sand.u32 %s46, 1
        %s248 = smul.addr %s247, 72
        %s249 = scalar_lea.vmem [#allocation3], %s248
        %p250 = pneg %p59
        %p251 = pneg %p56
        %p252 = pneg %p80
        %p253 = pneg %p77
        %p254 = pneg %p101
        %p255 = pneg %p98
        %p256 = pneg %p129
        %p257 = pneg %p126
        %s258 = sand.u32 %s116, 1
        %s259 = scalar_lea.sflag [#allocation5], %s258
        %s260 = sand.u32 %s116, 1
        %s261 = smul.addr %s260, 32
        %s262 = scalar_lea.vmem [#allocation9], %s261
        %p263 = pneg %p157
        %p264 = pneg %p154
        %s265 = sand.u32 %s144, 1
        %s266 = scalar_lea.sflag [#allocation11], %s265
        %s267 = sand.u32 %s144, 1
        %s268 = smul.addr %s267, 2
        %s269 = scalar_lea.vmem [#allocation10], %s268
        %s270 = smul.u32 8, %s31
        %v272 = vld [vmem:[%s232] sm:$0xf]
        %v273 = vld [vmem:[%s232 + $0x8] sm:$0xf]
        %v274 = vld [vmem:[%s232 + $0x10] sm:$0xf]
        %v275 = vld [vmem:[%s232 + $0x18] sm:$0xf]
        %v276 = vld [vmem:[%s232 + $0x20] sm:$0xf]
        %v277 = vld [vmem:[%s232 + $0x28] sm:$0xf]
        %v278 = vld [vmem:[%s232 + $0x30] sm:$0xf]
        %v279 = vld [vmem:[%s232 + $0x38] sm:$0xf]
        %v288 = vunpack.c.l.b16 %v272
        %v289 = vunpack.c.l.b16 %v273
        %v290 = vunpack.c.l.b16 %v274
        %v291 = vunpack.c.l.b16 %v275
        %v292 = vunpack.c.l.b16 %v276
        %v293 = vunpack.c.l.b16 %v277
        %v294 = vunpack.c.l.b16 %v278
        %v295 = vunpack.c.l.b16 %v279
        %v296 = vpack.c.b16 %v289, %v288
        %v297 = vpack.c.b16 %v291, %v290
        %v298 = vpack.c.b16 %v293, %v292
        %v299 = vpack.c.b16 %v295, %v294
        %vm304 = vcmask 64512
        %305 = vst.msk [vmem:[#allocation2] sm:$0xff] %vm304, %v296
        %306 = vst.msk [vmem:[#allocation2 + $0x8] sm:$0xff] %vm304, %v297
        %307 = vst.msk [vmem:[#allocation2 + $0x10] sm:$0xff] %vm304, %v298
        %308 = vst.msk [vmem:[#allocation2 + $0x18] sm:$0xff] %vm304, %v299
        %v309 = vld [vmem:[%s232] sm:$0xf]
        %v310 = vld [vmem:[%s232 + $0x4] sm:$0x1]
        %v311 = vld [vmem:[%s232 + $0x8] sm:$0xf]
        %v312 = vld [vmem:[%s232 + $0xc] sm:$0x1]
        %v313 = vld [vmem:[%s232 + $0x10] sm:$0xf]
        %v314 = vld [vmem:[%s232 + $0x14] sm:$0x1]
        %v315 = vld [vmem:[%s232 + $0x18] sm:$0xf]
        %v316 = vld [vmem:[%s232 + $0x1c] sm:$0x1]
        %v317 = vld [vmem:[%s232 + $0x20] sm:$0xf]
        %v318 = vld [vmem:[%s232 + $0x24] sm:$0x1]
        %v319 = vld [vmem:[%s232 + $0x28] sm:$0xf]
        %v320 = vld [vmem:[%s232 + $0x2c] sm:$0x1]
        %v321 = vld [vmem:[%s232 + $0x30] sm:$0xf]
        %v322 = vld [vmem:[%s232 + $0x34] sm:$0x1]
        %v323 = vld [vmem:[%s232 + $0x38] sm:$0xf]
        %v324 = vld [vmem:[%s232 + $0x3c] sm:$0x1]
        %vm325 = vsmask.f32 3328
        %vm326 = vsmask.f32 7440
        %vm327 = vmor %vm325, %vm326
        %v329 = vshrl.u32 %v309, 16
        %v331 = vrot.slane %v329, 4
        %v332 = vshll.u32 %v309, 16
        %v334 = vrot.slane %v332, 5
        %v335 = vor.u32 %v331, %v334
        %v336 = vrot.slane %v335, 4
        %v338 = vshll.u32 %v310, 16
        %v340 = vrot.slane %v338, 5
        %v341 = vsel %vm327, %v336, %v340
        %v343 = vshrl.u32 %v311, 16
        %v345 = vrot.slane %v343, 4
        %v346 = vshll.u32 %v311, 16
        %v348 = vrot.slane %v346, 5
        %v349 = vor.u32 %v345, %v348
        %v350 = vrot.slane %v349, 4
        %v352 = vshll.u32 %v312, 16
        %v354 = vrot.slane %v352, 5
        %v355 = vsel %vm327, %v350, %v354
        %v357 = vshrl.u32 %v313, 16
        %v359 = vrot.slane %v357, 4
        %v360 = vshll.u32 %v313, 16
        %v362 = vrot.slane %v360, 5
        %v363 = vor.u32 %v359, %v362
        %v364 = vrot.slane %v363, 4
        %v366 = vshll.u32 %v314, 16
        %v368 = vrot.slane %v366, 5
        %v369 = vsel %vm327, %v364, %v368
        %v371 = vshrl.u32 %v315, 16
        %v373 = vrot.slane %v371, 4
        %v374 = vshll.u32 %v315, 16
        %v376 = vrot.slane %v374, 5
        %v377 = vor.u32 %v373, %v376
        %v378 = vrot.slane %v377, 4
        %v380 = vshll.u32 %v316, 16
        %v382 = vrot.slane %v380, 5
        %v383 = vsel %vm327, %v378, %v382
        %v385 = vshrl.u32 %v317, 16
        %v387 = vrot.slane %v385, 4
        %v388 = vshll.u32 %v317, 16
        %v390 = vrot.slane %v388, 5
        %v391 = vor.u32 %v387, %v390
        %v392 = vrot.slane %v391, 4
        %v394 = vshll.u32 %v318, 16
        %v396 = vrot.slane %v394, 5
        %v397 = vsel %vm327, %v392, %v396
        %v399 = vshrl.u32 %v319, 16
        %v401 = vrot.slane %v399, 4
        %v402 = vshll.u32 %v319, 16
        %v404 = vrot.slane %v402, 5
        %v405 = vor.u32 %v401, %v404
        %v406 = vrot.slane %v405, 4
        %v408 = vshll.u32 %v320, 16
        %v410 = vrot.slane %v408, 5
        %v411 = vsel %vm327, %v406, %v410
        %v413 = vshrl.u32 %v321, 16
        %v415 = vrot.slane %v413, 4
        %v416 = vshll.u32 %v321, 16
        %v418 = vrot.slane %v416, 5
        %v419 = vor.u32 %v415, %v418
        %v420 = vrot.slane %v419, 4
        %v422 = vshll.u32 %v322, 16
        %v424 = vrot.slane %v422, 5
        %v425 = vsel %vm327, %v420, %v424
        %v427 = vshrl.u32 %v323, 16
        %v429 = vrot.slane %v427, 4
        %v430 = vshll.u32 %v323, 16
        %v432 = vrot.slane %v430, 5
        %v433 = vor.u32 %v429, %v432
        %v434 = vrot.slane %v433, 4
        %v436 = vshll.u32 %v324, 16
        %v438 = vrot.slane %v436, 5
        %v439 = vsel %vm327, %v434, %v438
        %v440 = vunpack.c.l.b16 %v341
        %v441 = vunpack.c.l.b16 %v355
        %v442 = vunpack.c.l.b16 %v369
        %v443 = vunpack.c.l.b16 %v383
        %v444 = vunpack.c.l.b16 %v397
        %v445 = vunpack.c.l.b16 %v411
        %v446 = vunpack.c.l.b16 %v425
        %v447 = vunpack.c.l.b16 %v439
        %v448 = vpack.c.b16 %v441, %v440
        %v449 = vpack.c.b16 %v443, %v442
        %v450 = vpack.c.b16 %v445, %v444
        %v451 = vpack.c.b16 %v447, %v446
        %452 = vrot.lane.b32.xlu0 %v448, 8
        %v453 = vpop.permute.xlu0 %452
        %454 = vrot.lane.b32.xlu0 %v449, 8
        %v455 = vpop.permute.xlu0 %454
        %456 = vrot.lane.b32.xlu0 %v450, 8
        %v457 = vpop.permute.xlu0 %456
        %458 = vrot.lane.b32.xlu0 %v451, 8
        %v459 = vpop.permute.xlu0 %458
        %vm464 = vcmask 130112
        %465 = vst.msk [vmem:[#allocation2] sm:$0xff] %vm464, %v453
        %466 = vst.msk [vmem:[#allocation2 + $0x8] sm:$0xff] %vm464, %v455
        %467 = vst.msk [vmem:[#allocation2 + $0x10] sm:$0xff] %vm464, %v457
        %468 = vst.msk [vmem:[#allocation2 + $0x18] sm:$0xff] %vm464, %v459
        %s469 = scalar_lea.vmem %s232, 8 [#allocation3]
        %v470 = vld [vmem:[%s469] sm:$0xf]
        %v471 = vld [vmem:[%s469 + $0x8] sm:$0xf]
        %v472 = vld [vmem:[%s469 + $0x10] sm:$0xf]
        %v473 = vld [vmem:[%s469 + $0x18] sm:$0xf]
        %v474 = vld [vmem:[%s469 + $0x20] sm:$0xf]
        %v475 = vld [vmem:[%s469 + $0x28] sm:$0xf]
        %v476 = vld [vmem:[%s469 + $0x30] sm:$0xf]
        %v477 = vld [vmem:[%s469 + $0x38] sm:$0xf]
        %v486 = vunpack.c.l.b16 %v470
        %v487 = vunpack.c.l.b16 %v471
        %v488 = vunpack.c.l.b16 %v472
        %v489 = vunpack.c.l.b16 %v473
        %v490 = vunpack.c.l.b16 %v474
        %v491 = vunpack.c.l.b16 %v475
        %v492 = vunpack.c.l.b16 %v476
        %v493 = vunpack.c.l.b16 %v477
        %v494 = vpack.c.b16 %v487, %v486
        %v495 = vpack.c.b16 %v489, %v488
        %v496 = vpack.c.b16 %v491, %v490
        %v497 = vpack.c.b16 %v493, %v492
        %498 = vrot.lane.b32.xlu0 %v494, 16
        %v499 = vpop.permute.xlu0 %498
        %500 = vrot.lane.b32.xlu0 %v495, 16
        %v501 = vpop.permute.xlu0 %500
        %502 = vrot.lane.b32.xlu0 %v496, 16
        %v503 = vpop.permute.xlu0 %502
        %504 = vrot.lane.b32.xlu0 %v497, 16
        %v505 = vpop.permute.xlu0 %504
        %vm510 = vcmask 195712
        %511 = vst.msk [vmem:[#allocation2] sm:$0xff] %vm510, %v499
        %512 = vst.msk [vmem:[#allocation2 + $0x8] sm:$0xff] %vm510, %v501
        %513 = vst.msk [vmem:[#allocation2 + $0x10] sm:$0xff] %vm510, %v503
        %514 = vst.msk [vmem:[#allocation2 + $0x18] sm:$0xff] %vm510, %v505
        %v515 = vld [vmem:[%s469] sm:$0xf]
        %v516 = vld [vmem:[%s469 + $0x4] sm:$0x1]
        %v517 = vld [vmem:[%s469 + $0x8] sm:$0xf]
        %v518 = vld [vmem:[%s469 + $0xc] sm:$0x1]
        %v519 = vld [vmem:[%s469 + $0x10] sm:$0xf]
        %v520 = vld [vmem:[%s469 + $0x14] sm:$0x1]
        %v521 = vld [vmem:[%s469 + $0x18] sm:$0xf]
        %v522 = vld [vmem:[%s469 + $0x1c] sm:$0x1]
        %v523 = vld [vmem:[%s469 + $0x20] sm:$0xf]
        %v524 = vld [vmem:[%s469 + $0x24] sm:$0x1]
        %v525 = vld [vmem:[%s469 + $0x28] sm:$0xf]
        %v526 = vld [vmem:[%s469 + $0x2c] sm:$0x1]
        %v527 = vld [vmem:[%s469 + $0x30] sm:$0xf]
        %v528 = vld [vmem:[%s469 + $0x34] sm:$0x1]
        %v529 = vld [vmem:[%s469 + $0x38] sm:$0xf]
        %v530 = vld [vmem:[%s469 + $0x3c] sm:$0x1]
        %v532 = vshrl.u32 %v515, 16
        %v534 = vrot.slane %v532, 4
        %v535 = vshll.u32 %v515, 16
        %v537 = vrot.slane %v535, 5
        %v538 = vor.u32 %v534, %v537
        %v539 = vrot.slane %v538, 4
        %v541 = vshll.u32 %v516, 16
        %v543 = vrot.slane %v541, 5
        %v544 = vsel %vm327, %v539, %v543
        %v546 = vshrl.u32 %v517, 16
        %v548 = vrot.slane %v546, 4
        %v549 = vshll.u32 %v517, 16
        %v551 = vrot.slane %v549, 5
        %v552 = vor.u32 %v548, %v551
        %v553 = vrot.slane %v552, 4
        %v555 = vshll.u32 %v518, 16
        %v557 = vrot.slane %v555, 5
        %v558 = vsel %vm327, %v553, %v557
        %v560 = vshrl.u32 %v519, 16
        %v562 = vrot.slane %v560, 4
        %v563 = vshll.u32 %v519, 16
        %v565 = vrot.slane %v563, 5
        %v566 = vor.u32 %v562, %v565
        %v567 = vrot.slane %v566, 4
        %v569 = vshll.u32 %v520, 16
        %v571 = vrot.slane %v569, 5
        %v572 = vsel %vm327, %v567, %v571
        %v574 = vshrl.u32 %v521, 16
        %v576 = vrot.slane %v574, 4
        %v577 = vshll.u32 %v521, 16
        %v579 = vrot.slane %v577, 5
        %v580 = vor.u32 %v576, %v579
        %v581 = vrot.slane %v580, 4
        %v583 = vshll.u32 %v522, 16
        %v585 = vrot.slane %v583, 5
        %v586 = vsel %vm327, %v581, %v585
        %v588 = vshrl.u32 %v523, 16
        %v590 = vrot.slane %v588, 4
        %v591 = vshll.u32 %v523, 16
        %v593 = vrot.slane %v591, 5
        %v594 = vor.u32 %v590, %v593
        %v595 = vrot.slane %v594, 4
        %v597 = vshll.u32 %v524, 16
        %v599 = vrot.slane %v597, 5
        %v600 = vsel %vm327, %v595, %v599
        %v602 = vshrl.u32 %v525, 16
        %v604 = vrot.slane %v602, 4
        %v605 = vshll.u32 %v525, 16
        %v607 = vrot.slane %v605, 5
        %v608 = vor.u32 %v604, %v607
        %v609 = vrot.slane %v608, 4
        %v611 = vshll.u32 %v526, 16
        %v613 = vrot.slane %v611, 5
        %v614 = vsel %vm327, %v609, %v613
        %v616 = vshrl.u32 %v527, 16
        %v618 = vrot.slane %v616, 4
        %v619 = vshll.u32 %v527, 16
        %v621 = vrot.slane %v619, 5
        %v622 = vor.u32 %v618, %v621
        %v623 = vrot.slane %v622, 4
        %v625 = vshll.u32 %v528, 16
        %v627 = vrot.slane %v625, 5
        %v628 = vsel %vm327, %v623, %v627
        %v630 = vshrl.u32 %v529, 16
        %v632 = vrot.slane %v630, 4
        %v633 = vshll.u32 %v529, 16
        %v635 = vrot.slane %v633, 5
        %v636 = vor.u32 %v632, %v635
        %v637 = vrot.slane %v636, 4
        %v639 = vshll.u32 %v530, 16
        %v641 = vrot.slane %v639, 5
        %v642 = vsel %vm327, %v637, %v641
        %v643 = vunpack.c.l.b16 %v544
        %v644 = vunpack.c.l.b16 %v558
        %v645 = vunpack.c.l.b16 %v572
        %v646 = vunpack.c.l.b16 %v586
        %v647 = vunpack.c.l.b16 %v600
        %v648 = vunpack.c.l.b16 %v614
        %v649 = vunpack.c.l.b16 %v628
        %v650 = vunpack.c.l.b16 %v642
        %v651 = vpack.c.b16 %v644, %v643
        %v652 = vpack.c.b16 %v646, %v645
        %v653 = vpack.c.b16 %v648, %v647
        %v654 = vpack.c.b16 %v650, %v649
        %655 = vrot.lane.b32.xlu0 %v651, 24
        %v656 = vpop.permute.xlu0 %655
        %657 = vrot.lane.b32.xlu0 %v652, 24
        %v658 = vpop.permute.xlu0 %657
        %659 = vrot.lane.b32.xlu0 %v653, 24
        %v660 = vpop.permute.xlu0 %659
        %661 = vrot.lane.b32.xlu0 %v654, 24
        %v662 = vpop.permute.xlu0 %661
        %vm667 = vcmask 261312
        %668 = vst.msk [vmem:[#allocation2] sm:$0xff] %vm667, %v656
        %669 = vst.msk [vmem:[#allocation2 + $0x8] sm:$0xff] %vm667, %v658
        %670 = vst.msk [vmem:[#allocation2 + $0x10] sm:$0xff] %vm667, %v660
        %671 = vst.msk [vmem:[#allocation2 + $0x18] sm:$0xff] %vm667, %v662
        %v672 = vld [vmem:[#allocation2] sm:$0xff]
        %v673 = vld [vmem:[#allocation2 + $0x8] sm:$0xff]
        %v674 = vld [vmem:[#allocation2 + $0x10] sm:$0xff]
        %v675 = vld [vmem:[#allocation2 + $0x18] sm:$0xff]
        %v676 = vld [vmem:[#allocation6] sm:$0xf]
        %v677 = vld [vmem:[#allocation6 + $0x4] sm:$0xf]
        %v678 = vld [vmem:[#allocation6 + $0x8] sm:$0xf]
        %v679 = vld [vmem:[#allocation6 + $0xc] sm:$0xf]
        %v680 = vld [vmem:[#allocation8] sm:$0x1]
        %v682 = vlaneseq
        %v683 = vshrl.u32 %v682, 7
        %v684 = vsub.s32 0, %v683
        %v685 = vrot.slane %v680, %v684
        %v691 = vunpack.c.l.b16 %v676
        %v692 = vunpack.c.l.b16 %v677
        %v693 = vunpack.c.l.b16 %v678
        %v694 = vunpack.c.l.b16 %v679
        %v695 = vpack.c.b16 %v692, %v691
        %v696 = vpack.c.b16 %v694, %v693
        %vm699 = vcmask 261120
        %v701 = vsel %vm699, %v672, 0
        %v704 = vsel %vm699, %v673, 0
        %v707 = vsel %vm699, %v674, 0
        %v710 = vsel %vm699, %v675, 0
        %712 = vmatprep.subr.bf16.mxu0 0
        %713 = vmatpush1.bf16.msra.mxu0 %v695
        %714 = vmatprep.subr.bf16.mxu0 0
        %715 = vmatpush1.bf16.msra.mxu0 %v696
        %716 = vmatprep.subr.bf16.mxu0 0
        %717 = vmatpush1.bf16.msra.mxu0 0
        %718 = vmatprep.subr.bf16.mxu0 0
        %719 = vmatpush1.bf16.msra.mxu0 0
        %720 = vmatprep.subr.bf16.mxu0 0
        %721 = vmatpush1.bf16.msra.mxu0 0
        %722 = vmatprep.subr.bf16.mxu0 0
        %723 = vmatpush1.bf16.msra.mxu0 0
        %724 = vmatprep.subr.bf16.mxu0 0
        %725 = vmatpush1.bf16.msra.mxu0 0
        %726 = vmatprep.subr.bf16.mxu0 0
        %727 = vmatpush1.bf16.msra.mxu0 0
        %728 = vmatprep.subr.bf16.mxu0 0
        %729 = vmatpush1.bf16.msra.mxu0 0
        %730 = vmatprep.subr.bf16.mxu0 0
        %731 = vmatpush1.bf16.msra.mxu0 0
        %732 = vmatprep.subr.bf16.mxu0 0
        %733 = vmatpush1.bf16.msra.mxu0 0
        %734 = vmatprep.subr.bf16.mxu0 0
        %735 = vmatpush1.bf16.msra.mxu0 0
        %736 = vmatprep.subr.bf16.mxu0 0
        %737 = vmatpush1.bf16.msra.mxu0 0
        %738 = vmatprep.subr.bf16.mxu0 0
        %739 = vmatpush1.bf16.msra.mxu0 0
        %740 = vmatprep.subr.bf16.mxu0 0
        %741 = vmatpush1.bf16.msra.mxu0 0
        %742 = vmatprep.subr.bf16.mxu0 0
        %743 = vmatpush1.bf16.msra.mxu0 0
        %744 = vmatprep.mubr.bf16.mxu0 0
        %745 = vmatmul.mubr.bf16.gmra.mrb[0].mxu0 %v701
        %v746 = vpop.f32.mrb[0].mxu0
        %v747 = vadd.f32 %v685, %v746
        %v748 = vpop.f32.mrb[0].mxu0
        %v749 = vpop.f32.mrb[0].mxu0
        %v750 = vadd.f32 %v685, %v749
        %v751 = vpop.f32.mrb[0].mxu0
        %752 = vmatprep.mubr.bf16.mxu0 0
        %753 = vmatmul.mubr.bf16.gmra.mrb[0].mxu0 %v704
        %v754 = vpop.f32.mrb[0].mxu0
        %v755 = vadd.f32 %v685, %v754
        %v756 = vpop.f32.mrb[0].mxu0
        %v757 = vpop.f32.mrb[0].mxu0
        %v758 = vadd.f32 %v685, %v757
        %v759 = vpop.f32.mrb[0].mxu0
        %760 = vmatprep.mubr.bf16.mxu0 0
        %761 = vmatmul.mubr.bf16.gmra.mrb[0].mxu0 %v707
        %v762 = vpop.f32.mrb[0].mxu0
        %v763 = vadd.f32 %v685, %v762
        %v764 = vpop.f32.mrb[0].mxu0
        %v765 = vpop.f32.mrb[0].mxu0
        %v766 = vadd.f32 %v685, %v765
        %v767 = vpop.f32.mrb[0].mxu0
        %768 = vmatprep.mubr.bf16.mxu0 0
        %769 = vmatmul.mubr.bf16.gmra.mrb[0].mxu0 %v710
        %v770 = vpop.f32.mrb[0].mxu0
        %v771 = vadd.f32 %v685, %v770
        %v772 = vpop.f32.mrb[0].mxu0
        %v773 = vpop.f32.mrb[0].mxu0
        %v774 = vadd.f32 %v685, %v773
        %v775 = vpop.f32.mrb[0].mxu0
        %776 = vdwg.mxu0
        %v777 = vpack.c.bf16 %v750, %v747
        %v778 = vpack.c.bf16 %v758, %v755
        %v779 = vpack.c.bf16 %v766, %v763
        %v780 = vpack.c.bf16 %v774, %v771
        %v785 = vunpack.c.l.b16 %v777
        %v786 = vunpack.c.h.b16 %v777
        %v787 = vunpack.c.l.b16 %v778
        %v788 = vunpack.c.h.b16 %v778
        %v789 = vunpack.c.l.b16 %v779
        %v790 = vunpack.c.h.b16 %v779
        %v791 = vunpack.c.l.b16 %v780
        %v792 = vunpack.c.h.b16 %v780
        %v793 = vpack.c.b16 %v785, %v785
        %v794 = vpack.c.b16 %v786, %v786
        %v795 = vpack.c.b16 %v787, %v787
        %v796 = vpack.c.b16 %v788, %v788
        %v797 = vpack.c.b16 %v789, %v789
        %v798 = vpack.c.b16 %v790, %v790
        %v799 = vpack.c.b16 %v791, %v791
        %v800 = vpack.c.b16 %v792, %v792
        %vm809 = vcmask 257024
        %810 = vst.msk [vmem:[%s262] sm:$0xf] %vm809, %v793
        %811 = vst.msk [vmem:[%s262 + $0x4] sm:$0xf] %vm809, %v794
        %812 = vst.msk [vmem:[%s262 + $0x8] sm:$0xf] %vm809, %v795
        %813 = vst.msk [vmem:[%s262 + $0xc] sm:$0xf] %vm809, %v796
        %814 = vst.msk [vmem:[%s262 + $0x10] sm:$0xf] %vm809, %v797
        %815 = vst.msk [vmem:[%s262 + $0x14] sm:$0xf] %vm809, %v798
        %816 = vst.msk [vmem:[%s262 + $0x18] sm:$0xf] %vm809, %v799
        %817 = vst.msk [vmem:[%s262 + $0x1c] sm:$0xf] %vm809, %v800
        %v818 = vsel %vm699, %v747, 0.0
        %v819 = vsel %vm699, %v750, 0.0
        %v820 = vadd.f32 %v818, %v819
        %v821 = vsel %vm699, %v755, 0.0
        %v822 = vadd.f32 %v820, %v821
        %v823 = vsel %vm699, %v758, 0.0
        %v824 = vadd.f32 %v822, %v823
        %v825 = vsel %vm699, %v763, 0.0
        %v826 = vadd.f32 %v824, %v825
        %v827 = vsel %vm699, %v766, 0.0
        %v828 = vadd.f32 %v826, %v827
        %v829 = vsel %vm699, %v771, 0.0
        %v830 = vadd.f32 %v828, %v829
        %v831 = vsel %vm699, %v774, 0.0
        %v832 = vadd.f32 %v830, %v831
        %v833 = vrot.slane %v832, 4
        %v834 = vadd.f32 %v832, %v833
        %v835 = vrot.slane %v834, 2
        %v836 = vadd.f32 %v834, %v835
        %v837 = vrot.slane %v836, 1
        %v838 = vadd.f32 %v836, %v837
        %vm839 = vcmask 253952
        %840 = vst.msk [vmem:[%s269] sm:$0x1] %vm839, %v838
        %v841 = vmul.f32 %v747, %v747
        %v842 = vmul.f32 %v750, %v750
        %v843 = vmul.f32 %v755, %v755
        %v844 = vmul.f32 %v758, %v758
        %v845 = vmul.f32 %v763, %v763
        %v846 = vmul.f32 %v766, %v766
        %v847 = vmul.f32 %v771, %v771
        %v848 = vmul.f32 %v774, %v774
        %v849 = vsel %vm699, %v841, 0.0
        %v850 = vsel %vm699, %v842, 0.0
        %v851 = vadd.f32 %v849, %v850
        %v852 = vsel %vm699, %v843, 0.0
        %v853 = vadd.f32 %v851, %v852
        %v854 = vsel %vm699, %v844, 0.0
        %v855 = vadd.f32 %v853, %v854
        %v856 = vsel %vm699, %v845, 0.0
        %v857 = vadd.f32 %v855, %v856
        %v858 = vsel %vm699, %v846, 0.0
        %v859 = vadd.f32 %v857, %v858
        %v860 = vsel %vm699, %v847, 0.0
        %v861 = vadd.f32 %v859, %v860
        %v862 = vsel %vm699, %v848, 0.0
        %v863 = vadd.f32 %v861, %v862
        %v864 = vrot.slane %v863, 4
        %v865 = vadd.f32 %v863, %v864
        %v866 = vrot.slane %v865, 2
        %v867 = vadd.f32 %v865, %v866
        %v868 = vrot.slane %v867, 1
        %v869 = vadd.f32 %v867, %v868
        %870 = vst.msk [vmem:[%s269 + $0x1] sm:$0x1] %vm839, %v869
        %s871 = sand.u32 %s116, 1
        %s872 = scalar_lea.sflag [#allocation5], %s871
        %s873 = sand.u32 %s116, 1
        %s874 = smul.addr %s873, 32
        %s875 = scalar_lea.vmem [#allocation9], %s874
        %s876 = sand.u32 %s144, 1
        %s877 = scalar_lea.sflag [#allocation11], %s876
        %s878 = sand.u32 %s144, 1
        %s879 = smul.addr %s878, 2
        %s880 = scalar_lea.vmem [#allocation10], %s879
        // Predicated region
        $region45: #{complex_decoder_forward.2} parent=31 // pred_check
          %p881 = pneg %p126
        $region46: #{complex_decoder_forward.2} parent=31 // pred_check_branch
          %883 = sbr.rel (%p881) target = $region48
        $region47: #{complex_decoder_forward.2} parent=31 // pred_region
          %s884 = smul.u32 8, %s31
          %s886 = ssub.s32 512, 512
          %887 = vsyncadd %s872, %s886
          %s888 = smul.addr %s30, 8
          %s889 = sadd.s32 %s884, %s888
          %s890 = smul.addr %s889, 64
          %s891 = scalar_lea.hbm %s3, %s890
          %s892 = sshll.u32 %s875, 4
          %s893 = int_to_ptr.vmem [resolvable:$true] %s892
          %898 = dma.vmem_to_hbm [thread:$0]  %s893, 512, %s891, %s872, 64, 64, 4
        $region48: #{complex_decoder_forward.2} parent=31 // pred_fallthru
          _
        // Predicated region
        $region49: #{complex_decoder_forward.2} parent=31 // pred_check
          %p899 = pneg %p154
        $region50: #{complex_decoder_forward.2} parent=31 // pred_check_branch
          %901 = sbr.rel (%p899) target = $region52
        $region51: #{complex_decoder_forward.2} parent=31 // pred_region
          %s903 = ssub.s32 32, 32
          %904 = vsyncadd %s877, %s903
          %s905 = sadd.s32 %s31, %s30
          %s906 = smul.addr %s905, 32
          %s907 = scalar_lea.hbm %s4, %s906
          %s909 = sshll.u32 %s880, 4
          %s910 = int_to_ptr.vmem [resolvable:$true] %s909
          %912 = dma.vmem_to_hbm [thread:$0]  %s910, 32, %s907, %s877
        $region52: #{complex_decoder_forward.2} parent=31 // pred_fallthru
          _
      $region32: #{complex_decoder_forward.2} parent=5 // pred_fallthru
        _
      %p913 = scmp.le.s32.totalorder 2, %s21
      // Predicated region
      $region53: #{complex_decoder_forward.2} parent=5 // pred_check
        %p914 = pneg %p913
      $region54: #{complex_decoder_forward.2} parent=5 // pred_check_branch
        %916 = sbr.rel (%p914) target = $region56
      $region55: #{complex_decoder_forward.2} parent=5 // pred_region
        %s917 = ssub.s32 %s21, 2
        // Predicated region
        $region57: #{complex_decoder_forward.2} parent=55 // pred_check
          %p918 = pneg %p132
        $region58: #{complex_decoder_forward.2} parent=55 // pred_check_branch
          %920 = sbr.rel (%p918) target = $region60
        $region59: #{complex_decoder_forward.2} parent=55 // pred_region
          %s921 = sand.u32 %s117, 1
          %s922 = scalar_lea.sflag [#allocation5], %s921
          %s923 = sand.u32 %s117, 1
          %s924 = smul.addr %s923, 32
          %s925 = scalar_lea.vmem [#allocation9], %s924
          %926 = dma.done %s922, 512
        $region60: #{complex_decoder_forward.2} parent=55 // pred_fallthru
          _
        // Predicated region
        $region61: #{complex_decoder_forward.2} parent=55 // pred_check
          %p927 = pneg %p160
        $region62: #{complex_decoder_forward.2} parent=55 // pred_check_branch
          %929 = sbr.rel (%p927) target = $region64
        $region63: #{complex_decoder_forward.2} parent=55 // pred_region
          %s930 = sand.u32 %s145, 1
          %s931 = scalar_lea.sflag [#allocation11], %s930
          %s932 = sand.u32 %s145, 1
          %s933 = smul.addr %s932, 2
          %s934 = scalar_lea.vmem [#allocation10], %s933
          %935 = dma.done %s931, 32
        $region64: #{complex_decoder_forward.2} parent=55 // pred_fallthru
          _
      $region56: #{complex_decoder_forward.2} parent=5 // pred_fallthru
        _
    $region6: #{complex_decoder_forward.2} parent=1 // loop_footer
      %s25 = sadd.s32 1, %s21
    $region7: #{complex_decoder_forward.2} parent=1 // loop_footer_branch
      %20 = sbr.rel target = $region3
    $region8: #{complex_decoder_forward.2} parent=1 // loop_exit
      _
    %936 = vsyncpa [#allocation4], 1
    %s937 = scalar_lea.sflag [#allocation4], 1
    %938 = vsyncpa %s937, 1
    %939 = vsyncpa [#allocation7], 1
    %940 = vsyncpa [#allocation5], 1
    %s941 = scalar_lea.sflag [#allocation5], 1
    %942 = vsyncpa %s941, 1
    %943 = vsyncpa [#allocation11], 1
    %s944 = scalar_lea.sflag [#allocation11], 1
    %945 = vsyncpa %s944, 1

</llo_original>
